<compile_context>
chip_gen: v7x
topology: tpu7x:2x2x1
jax: 0.10.0
libtpu: 0.0.40
codegen_flags: <defaults>
</compile_context>

<pallas_src>
import functools

import jax
import jax.numpy as jnp
from jax import lax
from jax.experimental import pallas as pl
from jax.experimental.pallas import tpu as pltpu

H1 = 20   # fc1/fc3 output width (encoder/decoder bottleneck width)
H2 = 10   # fc2 output width (innermost code)


def _round_up(x, m):
    return ((x + m - 1) // m) * m


def sae_kernel(x_ref, w1_ref, b1_ref, w2_ref, b2_ref, w3_ref, b3_ref,
               w4_ref, b4_ref, o_ref, h_ref):
    """One (batch-tile i, F-tile j) grid step.

    At j == 0 the 20-dim bottleneck activation for this batch tile is computed
    once into VMEM scratch; every F tile then computes its slice of fc4.
    """
    j = pl.program_id(1)

    @pl.when(j == 0)
    def _():
        x = x_ref[...]                                      # (TM, Fin_pad) bf16
        # fc1: x @ W1.T  (W1 in PyTorch (out, in) layout -> lane-dense F axis)
        z1 = lax.dot_general(x, w1_ref[...],
                             dimension_numbers=(((1,), (1,)), ((), ())),
                             preferred_element_type=jnp.float32)
        h = jax.nn.sigmoid(z1 + b1_ref[...])                # (TM, 20) f32
        # fc2 + sigmoid
        z2 = jnp.dot(h.astype(jnp.bfloat16), w2_ref[...],
                     preferred_element_type=jnp.float32) + b2_ref[...]
        h = jax.nn.sigmoid(z2)                              # (TM, 10)
        # fc3 + sigmoid
        z3 = jnp.dot(h.astype(jnp.bfloat16), w3_ref[...],
                     preferred_element_type=jnp.float32) + b3_ref[...]
        h = jax.nn.sigmoid(z3)                              # (TM, 20)
        h_ref[...] = h.astype(h_ref.dtype)                  # bottleneck -> scratch

    # fc4 on the current F tile (no activation).
    y = jnp.dot(h_ref[...], w4_ref[...],
                preferred_element_type=jnp.float32) + b4_ref[...]
    o_ref[...] = y.astype(o_ref.dtype)


@functools.partial(jax.jit, static_argnames=("tm", "tf"))
def sae_forward(x, w1, b1, w2, b2, w3, b3, w4, b4, *, tm=128, tf=512):
    """Weight layouts expected:
         w1: (20, n_movies)  == fc1.weight      (PyTorch (out, in); lane-dense F)
         w2: (20, 10)        == fc2.weight.T    ((in, out))
         w3: (10, 20)        == fc3.weight.T    ((in, out))
         w4: (20, n_movies)  == fc4.weight.T    ((in, out); lane-dense F)
         b*: (1, out_features), float32
    """
    B, F = x.shape
    out_dtype = x.dtype

    # --- batch tiling: keep >=2 tiles when possible so megacore has work ---
    tm = min(tm, _round_up(B, 8))
    nb = pl.cdiv(B, tm)
    if nb == 1 and B > 8:
        tm = _round_up(pl.cdiv(B, 2), 8)
        nb = pl.cdiv(B, tm)
    b_pad = nb * tm

    # --- F tiling: encoder-side padding decoupled from decoder-side tiles --
    f_pad_in = _round_up(F, 128)          # x / W1 lanes (fc1 contraction)
    if F <= tf:
        tf = _round_up(F, 128)
    nf = pl.cdiv(F, tf)
    f_pad_out = nf * tf                   # W4 / b4 / output lanes

    # --- pad + cast matmul operands to bf16 (f32 epilogue stays f32) -------
    xp = jnp.pad(x, ((0, b_pad - B), (0, f_pad_in - F))).astype(jnp.bfloat16)
    w1p = jnp.pad(w1, ((0, 0), (0, f_pad_in - F))).astype(jnp.bfloat16)
    w4p = jnp.pad(w4, ((0, 0), (0, f_pad_out - F))).astype(jnp.bfloat16)
    b4p = jnp.pad(b4, ((0, 0), (0, f_pad_out - F)))
    w2b = w2.astype(jnp.bfloat16)
    w3b = w3.astype(jnp.bfloat16)

    const = lambda i, j: (0, 0)

    # --- VMEM budget (double-buffered tiles + headroom), portable to v7x ---
    tile_bytes = (2 * tm * f_pad_in * 2       # x tile (bf16), 2 buffers
                  + 2 * 32 * f_pad_in * 2     # W1 resident (sublane-padded)
                  + 2 * 32 * tf * 2           # W4 tile (sublane-padded)
                  + 2 * tm * tf * 4           # output tile
                  + 2 * 8 * tf * 4            # b4 tile
                  + tm * 128 * 4)             # scratch + small weights/biases
    vmem_limit = int(min(48 * 1024 * 1024, max(16 * 1024 * 1024, 2 * tile_bytes)))

    flops = 2 * b_pad * (f_pad_in * H1 + H1 * H2 + H2 * H1 + H1 * f_pad_out)
    bytes_accessed = int(
        xp.size * 2 + w1p.size * 2 + w2b.size * 2 + w3b.size * 2 + w4p.size * 2
        + (b1.size + b2.size + b3.size + b4p.size) * 4
        + b_pad * f_pad_out * jnp.dtype(out_dtype).itemsize)

    out = pl.pallas_call(
        sae_kernel,
        out_shape=jax.ShapeDtypeStruct((b_pad, f_pad_out), out_dtype),
        grid_spec=pltpu.PrefetchScalarGridSpec(
            num_scalar_prefetch=0,
            grid=(nb, nf),
            in_specs=[
                pl.BlockSpec((tm, f_pad_in), lambda i, j: (i, 0)),  # x (full F per batch tile)
                pl.BlockSpec((H1, f_pad_in), const),                # W1 (lane-dense F)
                pl.BlockSpec((1, H1), const),                       # b1
                pl.BlockSpec((H1, H2), const),                      # W2
                pl.BlockSpec((1, H2), const),                       # b2
                pl.BlockSpec((H2, H1), const),                      # W3
                pl.BlockSpec((1, H1), const),                       # b3
                pl.BlockSpec((H1, tf), lambda i, j: (0, j)),        # W4 tile over F
                pl.BlockSpec((1, tf), lambda i, j: (0, j)),         # b4 tile over F
            ],
            out_specs=pl.BlockSpec((tm, tf), lambda i, j: (i, j)),
            scratch_shapes=[pltpu.VMEM((tm, H1), jnp.bfloat16)],    # bottleneck h
        ),
        compiler_params=pltpu.CompilerParams(
            dimension_semantics=("parallel", "arbitrary"),
            vmem_limit_bytes=vmem_limit,
        ),
        cost_estimate=pl.CostEstimate(
            flops=flops,
            transcendentals=b_pad * (H1 + H2 + H1),
            bytes_accessed=bytes_accessed,
        ),
    )(xp, w1p, b1, w2b, b2, w3b, b3, w4p, b4p)

    return out[:B, :F]


def _linear_init(key, fan_in, fan_out, w_shape, dtype=jnp.float32):
    # Deterministic init mimicking PyTorch nn.Linear: U(-1/sqrt(fan_in), +).
    kw, kb = jax.random.split(key)
    bound = 1.0 / (fan_in ** 0.5)
    w = jax.random.uniform(kw, w_shape, dtype, -bound, bound)
    b = jax.random.uniform(kb, (1, fan_out), dtype, -bound, bound)
    return w, b


def init_params(key, n_movies, dtype=jnp.float32):
    k1, k2, k3, k4 = jax.random.split(key, 4)
    w1, b1 = _linear_init(k1, n_movies, H1, (H1, n_movies), dtype)  # fc1.weight layout
    w2, b2 = _linear_init(k2, H1, H2, (H1, H2), dtype)              # fc2.weight.T
    w3, b3 = _linear_init(k3, H2, H1, (H2, H1), dtype)              # fc3.weight.T
    w4, b4 = _linear_init(k4, H1, n_movies, (H1, n_movies), dtype)  # fc4.weight.T
    return (w1, b1, w2, b2, w3, b3, w4, b4)


def sae_ref_f32(x, w1, b1, w2, b2, w3, b3, w4, b4):
    h = jax.nn.sigmoid(x @ w1.T + b1)
    h = jax.nn.sigmoid(h @ w2 + b2)
    h = jax.nn.sigmoid(h @ w3 + b3)
    return h @ w4 + b4


def sae_ref_mixed(x, w1, b1, w2, b2, w3, b3, w4, b4):
    # Mirrors the kernel's mixed precision: bf16 matmul inputs, f32 accumulation,
    # f32 bias + sigmoid, bf16 bottleneck fed to fc4.
    bf = jnp.bfloat16
    h = jax.nn.sigmoid(
        lax.dot_general(x.astype(bf), w1.astype(bf), (((1,), (1,)), ((), ())),
                        preferred_element_type=jnp.float32) + b1)
    h = jax.nn.sigmoid(jnp.dot(h.astype(bf), w2.astype(bf),
                               preferred_element_type=jnp.float32) + b2)
    h = jax.nn.sigmoid(jnp.dot(h.astype(bf), w3.astype(bf),
                               preferred_element_type=jnp.float32) + b3)
    return jnp.dot(h.astype(bf), w4.astype(bf),
                   preferred_element_type=jnp.float32) + b4


if __name__ == "__main__":
    # n_movies is data-dependent in the original script; pick small-but-ragged
    # shapes so the pad/slice path, the multi-F-tile path, and >=2 parallel
    # batch tiles are all exercised.
    N_MOVIES = 1200
    BATCH = 200

    key = jax.random.PRNGKey(0)
    kx, kp = jax.random.split(key)

    # Ratings-like input: values in [0, 5], shape [batch, n_movies].
    x = jax.random.uniform(kx, (BATCH, N_MOVIES), jnp.float32, 0.0, 5.0)
    params = init_params(kp, N_MOVIES)

    out = sae_forward(x, *params)
    out = jax.block_until_ready(out)
    assert out.shape == (BATCH, N_MOVIES)

    ref_mixed = sae_ref_mixed(x, *params)   # same precision recipe as the kernel
    ref_f32 = sae_ref_f32(x, *params)       # pure f32 semantics check
    assert jnp.allclose(out, ref_mixed, atol=1e-2, rtol=1e-2), \
        float(jnp.max(jnp.abs(out - ref_mixed)))
    assert float(jnp.max(jnp.abs(out - ref_f32))) < 1e-1

    print("KERNEL_OK")
</pallas_src>

<mosaic_0001>
module attributes {stable_mosaic.version = 11 : i64} {
  func.func @sae_kernel(%arg0: i32, %arg1: i32, %arg2: memref<128x1280xbf16, #tpu.memory_space<vmem>>, %arg3: memref<20x1280xbf16, #tpu.memory_space<vmem>>, %arg4: memref<1x20xf32, #tpu.memory_space<vmem>>, %arg5: memref<20x10xbf16, #tpu.memory_space<vmem>>, %arg6: memref<1x10xf32, #tpu.memory_space<vmem>>, %arg7: memref<10x20xbf16, #tpu.memory_space<vmem>>, %arg8: memref<1x20xf32, #tpu.memory_space<vmem>>, %arg9: memref<20x512xbf16, #tpu.memory_space<vmem>>, %arg10: memref<1x512xf32, #tpu.memory_space<vmem>>, %arg11: memref<128x512xf32, #tpu.memory_space<vmem>>, %arg12: memref<128x20xbf16, #tpu.memory_space<vmem>>) attributes {dimension_semantics = [#tpu.dimension_semantics<parallel>, #tpu.dimension_semantics<arbitrary>], iteration_bounds = array<i64: 2, 3>, scalar_prefetch = 0 : i64, scratch_operands = 1 : i64, tpu.core_type = #tpu.core_type<tc>, window_params = [{transform_indices = @transform_0, window_bounds = array<i64: 128, 1280>}, {pipeline_mode = #tpu.pipeline_mode<synchronous>, transform_indices = @transform_1, window_bounds = array<i64: 20, 1280>}, {pipeline_mode = #tpu.pipeline_mode<synchronous>, transform_indices = @transform_2, window_bounds = array<i64: 1, 20>}, {pipeline_mode = #tpu.pipeline_mode<synchronous>, transform_indices = @transform_3, window_bounds = array<i64: 20, 10>}, {pipeline_mode = #tpu.pipeline_mode<synchronous>, transform_indices = @transform_4, window_bounds = array<i64: 1, 10>}, {pipeline_mode = #tpu.pipeline_mode<synchronous>, transform_indices = @transform_5, window_bounds = array<i64: 10, 20>}, {pipeline_mode = #tpu.pipeline_mode<synchronous>, transform_indices = @transform_6, window_bounds = array<i64: 1, 20>}, {transform_indices = @transform_7, window_bounds = array<i64: 20, 512>}, {transform_indices = @transform_8, window_bounds = array<i64: 1, 512>}, {transform_indices = @transform_9, window_bounds = array<i64: 128, 512>}]} {
    %c0_i32 = arith.constant 0 : i32
    %0 = arith.cmpi eq, %arg1, %c0_i32 : i32
    %1 = arith.extui %0 : i1 to i32
    %c0_i32_0 = arith.constant 0 : i32
    %2 = arith.cmpi ne, %1, %c0_i32_0 : i32
    scf.if %2 {
      %c0_8 = arith.constant 0 : index
      %c0_9 = arith.constant 0 : index
      %10 = vector.load %arg2[%c0_8, %c0_9] : memref<128x1280xbf16, #tpu.memory_space<vmem>>, vector<128x1280xbf16>
      %c0_10 = arith.constant 0 : index
      %c0_11 = arith.constant 0 : index
      %11 = vector.load %arg3[%c0_10, %c0_11] : memref<20x1280xbf16, #tpu.memory_space<vmem>>, vector<20x1280xbf16>
      %cst_12 = arith.constant dense<0.000000e+00> : vector<128x20xf32>
      %12 = tpu.matmul %10, %11, %cst_12 {dimension_numbers = #tpu.dot_dimension_numbers<[1], [1], [0], [0], [0, 0, 1, 0], [], []>} : vector<128x1280xbf16>, vector<20x1280xbf16>, vector<128x20xf32> -> vector<128x20xf32>
      %c0_13 = arith.constant 0 : index
      %c0_14 = arith.constant 0 : index
      %13 = vector.load %arg4[%c0_13, %c0_14] : memref<1x20xf32, #tpu.memory_space<vmem>>, vector<1x20xf32>
      %14 = vector.broadcast %13 : vector<1x20xf32> to vector<128x20xf32>
      %15 = arith.addf %12, %14 : vector<128x20xf32>
      %16 = arith.negf %15 : vector<128x20xf32>
      %17 = math.exp %16 : vector<128x20xf32>
      %cst_15 = arith.constant 1.000000e+00 : f32
      %18 = vector.broadcast %cst_15 : f32 to vector<128x20xf32>
      %19 = arith.addf %18, %17 : vector<128x20xf32>
      %20 = arith.divf %18, %19 : vector<128x20xf32>
      %21 = arith.truncf %20 : vector<128x20xf32> to vector<128x20xbf16>
      %c0_16 = arith.constant 0 : index
      %c0_17 = arith.constant 0 : index
      %22 = vector.load %arg5[%c0_16, %c0_17] : memref<20x10xbf16, #tpu.memory_space<vmem>>, vector<20x10xbf16>
      %cst_18 = arith.constant dense<0.000000e+00> : vector<128x10xf32>
      %23 = tpu.matmul %21, %22, %cst_18 {dimension_numbers = #tpu.dot_dimension_numbers<[1], [0], [0], [1], [0, 0, 1, 1], [], []>} : vector<128x20xbf16>, vector<20x10xbf16>, vector<128x10xf32> -> vector<128x10xf32>
      %c0_19 = arith.constant 0 : index
      %c0_20 = arith.constant 0 : index
      %24 = vector.load %arg6[%c0_19, %c0_20] : memref<1x10xf32, #tpu.memory_space<vmem>>, vector<1x10xf32>
      %25 = vector.broadcast %24 : vector<1x10xf32> to vector<128x10xf32>
      %26 = arith.addf %23, %25 : vector<128x10xf32>
      %27 = arith.negf %26 : vector<128x10xf32>
      %28 = math.exp %27 : vector<128x10xf32>
      %cst_21 = arith.constant 1.000000e+00 : f32
      %29 = vector.broadcast %cst_21 : f32 to vector<128x10xf32>
      %30 = arith.addf %29, %28 : vector<128x10xf32>
      %31 = arith.divf %29, %30 : vector<128x10xf32>
      %32 = arith.truncf %31 : vector<128x10xf32> to vector<128x10xbf16>
      %c0_22 = arith.constant 0 : index
      %c0_23 = arith.constant 0 : index
      %33 = vector.load %arg7[%c0_22, %c0_23] : memref<10x20xbf16, #tpu.memory_space<vmem>>, vector<10x20xbf16>
      %cst_24 = arith.constant dense<0.000000e+00> : vector<128x20xf32>
      %34 = tpu.matmul %32, %33, %cst_24 {dimension_numbers = #tpu.dot_dimension_numbers<[1], [0], [0], [1], [0, 0, 1, 1], [], []>} : vector<128x10xbf16>, vector<10x20xbf16>, vector<128x20xf32> -> vector<128x20xf32>
      %c0_25 = arith.constant 0 : index
      %c0_26 = arith.constant 0 : index
      %35 = vector.load %arg8[%c0_25, %c0_26] : memref<1x20xf32, #tpu.memory_space<vmem>>, vector<1x20xf32>
      %36 = vector.broadcast %35 : vector<1x20xf32> to vector<128x20xf32>
      %37 = arith.addf %34, %36 : vector<128x20xf32>
      %38 = arith.negf %37 : vector<128x20xf32>
      %39 = math.exp %38 : vector<128x20xf32>
      %cst_27 = arith.constant 1.000000e+00 : f32
      %40 = vector.broadcast %cst_27 : f32 to vector<128x20xf32>
      %41 = arith.addf %40, %39 : vector<128x20xf32>
      %42 = arith.divf %40, %41 : vector<128x20xf32>
      %43 = arith.truncf %42 : vector<128x20xf32> to vector<128x20xbf16>
      %c0_28 = arith.constant 0 : index
      %c0_29 = arith.constant 0 : index
      %44 = vector.load %arg12[%c0_28, %c0_29] : memref<128x20xbf16, #tpu.memory_space<vmem>>, vector<128x20xbf16>
      tpu.vector_store %arg12[%c0_28, %c0_29], %43 {strides = array<i32>} : memref<128x20xbf16, #tpu.memory_space<vmem>>, vector<128x20xbf16>,
    } else {
    }
    %c0 = arith.constant 0 : index
    %c0_1 = arith.constant 0 : index
    %3 = vector.load %arg12[%c0, %c0_1] : memref<128x20xbf16, #tpu.memory_space<vmem>>, vector<128x20xbf16>
    %c0_2 = arith.constant 0 : index
    %c0_3 = arith.constant 0 : index
    %4 = vector.load %arg9[%c0_2, %c0_3] : memref<20x512xbf16, #tpu.memory_space<vmem>>, vector<20x512xbf16>
    %cst = arith.constant dense<0.000000e+00> : vector<128x512xf32>
    %5 = tpu.matmul %3, %4, %cst {dimension_numbers = #tpu.dot_dimension_numbers<[1], [0], [0], [1], [0, 0, 1, 1], [], []>} : vector<128x20xbf16>, vector<20x512xbf16>, vector<128x512xf32> -> vector<128x512xf32>
    %c0_4 = arith.constant 0 : index
    %c0_5 = arith.constant 0 : index
    %6 = vector.load %arg10[%c0_4, %c0_5] : memref<1x512xf32, #tpu.memory_space<vmem>>, vector<1x512xf32>
    %7 = vector.broadcast %6 : vector<1x512xf32> to vector<128x512xf32>
    %8 = arith.addf %5, %7 : vector<128x512xf32>
    %c0_6 = arith.constant 0 : index
    %c0_7 = arith.constant 0 : index
    %9 = vector.load %arg11[%c0_6, %c0_7] : memref<128x512xf32, #tpu.memory_space<vmem>>, vector<128x512xf32>
    tpu.vector_store %arg11[%c0_6, %c0_7], %8 {strides = array<i32>} : memref<128x512xf32, #tpu.memory_space<vmem>>, vector<128x512xf32>,
    return
  }
  func.func @transform_0(%arg0: i32, %arg1: i32) -> (i32, i32) {
    %c0_i32 = arith.constant 0 : i32
    %c0_i32_0 = arith.constant 0 : i32
    return %arg0, %c0_i32 : i32, i32
  }
  func.func @transform_1(%arg0: i32, %arg1: i32) -> (i32, i32) {
    %c0_i32 = arith.constant 0 : i32
    %c0_i32_0 = arith.constant 0 : i32
    %c0_i32_1 = arith.constant 0 : i32
    return %c0_i32, %c0_i32_0 : i32, i32
  }
  func.func @transform_2(%arg0: i32, %arg1: i32) -> (i32, i32) {
    %c0_i32 = arith.constant 0 : i32
    %c0_i32_0 = arith.constant 0 : i32
    %c0_i32_1 = arith.constant 0 : i32
    return %c0_i32, %c0_i32_0 : i32, i32
  }
  func.func @transform_3(%arg0: i32, %arg1: i32) -> (i32, i32) {
    %c0_i32 = arith.constant 0 : i32
    %c0_i32_0 = arith.constant 0 : i32
    %c0_i32_1 = arith.constant 0 : i32
    return %c0_i32, %c0_i32_0 : i32, i32
  }
  func.func @transform_4(%arg0: i32, %arg1: i32) -> (i32, i32) {
    %c0_i32 = arith.constant 0 : i32
    %c0_i32_0 = arith.constant 0 : i32
    %c0_i32_1 = arith.constant 0 : i32
    return %c0_i32, %c0_i32_0 : i32, i32
  }
  func.func @transform_5(%arg0: i32, %arg1: i32) -> (i32, i32) {
    %c0_i32 = arith.constant 0 : i32
    %c0_i32_0 = arith.constant 0 : i32
    %c0_i32_1 = arith.constant 0 : i32
    return %c0_i32, %c0_i32_0 : i32, i32
  }
  func.func @transform_6(%arg0: i32, %arg1: i32) -> (i32, i32) {
    %c0_i32 = arith.constant 0 : i32
    %c0_i32_0 = arith.constant 0 : i32
    %c0_i32_1 = arith.constant 0 : i32
    return %c0_i32, %c0_i32_0 : i32, i32
  }
  func.func @transform_7(%arg0: i32, %arg1: i32) -> (i32, i32) {
    %c0_i32 = arith.constant 0 : i32
    %c0_i32_0 = arith.constant 0 : i32
    return %c0_i32, %arg1 : i32, i32
  }
  func.func @transform_8(%arg0: i32, %arg1: i32) -> (i32, i32) {
    %c0_i32 = arith.constant 0 : i32
    %c0_i32_0 = arith.constant 0 : i32
    return %c0_i32, %arg1 : i32, i32
  }
  func.func @transform_9(%arg0: i32, %arg1: i32) -> (i32, i32) {
    %c0_i32 = arith.constant 0 : i32
    return %arg0, %arg1 : i32, i32
  }
}

</mosaic_0001>

<llo_original>
// kernel: sae_forward.1
$region0: #{sae_forward.1}
  #allocation0 [shape = 'u32[]', space=smem, size = 0x4, offset = 0x4, fixed_abs, tag = 'smem constant byte address 0x4 - core index']
  #allocation1 [shape = 'u32[144,128]{1,0:T(1,128)}', space=vmem, size = 0x12000, scoped, tag = 'internal scratch']
  #allocation2 [shape = 'bf16[128,20]{1,0:T(16,128)(2,1)}', space=vmem, size = 0x8000, scoped, tag = 'scratch operand']
  %s0 = inlined_call_operand.vmem [shape: bf16[256,1280], index: 0, kind: input, shape index: {}]
  %s1 = inlined_call_operand.vmem [shape: bf16[20,1280], index: 1, kind: input, shape index: {}]
  %s2 = inlined_call_operand.vmem [shape: f32[1,20], index: 2, kind: input, shape index: {}]
  %s3 = inlined_call_operand.vmem [shape: bf16[20,10], index: 3, kind: input, shape index: {}]
  %s4 = inlined_call_operand.vmem [shape: f32[1,10], index: 4, kind: input, shape index: {}]
  %s5 = inlined_call_operand.vmem [shape: bf16[10,20], index: 5, kind: input, shape index: {}]
  %s6 = inlined_call_operand.vmem [shape: f32[1,20], index: 6, kind: input, shape index: {}]
  %s7 = inlined_call_operand.vmem [shape: bf16[20,1536], index: 7, kind: input, shape index: {}]
  %s8 = inlined_call_operand.vmem [shape: f32[1,1536], index: 8, kind: input, shape index: {}]
  %s9 = inlined_call_operand.vmem [shape: f32[256,1536], index: 9, kind: output, shape index: {}]
  %s10 = sld [smem:[#allocation0]]
  $region115: #{sae_forward.1} parent=0
    _
  %s12 = ssub.s32 1, %s10
  %s13 = scalar_select 0, %s12, %s10
  $region1: #{sae_forward.1} parent=0
    #allocation3 [shape = 'u8[49152]{0}', space=vmem, size = 0xc000, scoped, tag = 'input window, operand 7']
    #allocation4 [shape = 'u8[524288]{0}', space=vmem, size = 0x80000, scoped, tag = 'output window, operand 0']
    loop: start=0, step=1, limit=8
    $region2: #{sae_forward.1} parent=1 // loop_pre_header
      _
    $region3: #{sae_forward.1} parent=1 // loop_header
      %s15 = sphi 0, %s19
      %p16 = scmp.ge.s32.totalorder %s15, 8
      %s22 = sphi 0, %s34
      %s23 = sphi 0, %s30
      %s24 = sphi 0, %s22
      %s25 = sphi 0, %s23
      %s26 = sphi 0, %s24
      %s27 = sphi 0, %s25
      %s37 = sphi 0, %s39
      %s40 = sphi 0, %s37
      %s41 = sphi 0, %s40
      %s57 = sphi 0, %s41
      %s61 = sphi 0, %s61
      %s63 = sphi 0, %s61
      %s64 = sphi 0, %s63
      %s78 = sphi 0, %s64
      %s82 = sphi 0, %s82
      %s84 = sphi 0, %s82
      %s85 = sphi 0, %s84
      %s99 = sphi 0, %s85
      %s103 = sphi 0, %s103
      %s105 = sphi 0, %s103
      %s106 = sphi 0, %s105
      %s120 = sphi 0, %s106
      %s124 = sphi 0, %s124
      %s126 = sphi 0, %s124
      %s127 = sphi 0, %s126
      %s141 = sphi 0, %s127
      %s145 = sphi 0, %s145
      %s147 = sphi 0, %s145
      %s148 = sphi 0, %s147
      %s162 = sphi 0, %s148
      %s166 = sphi 0, %s166
      %s168 = sphi 0, %s166
      %s169 = sphi 0, %s168
      %s183 = sphi 0, %s169
      %s189 = sphi 0, %s191
      %s192 = sphi 0, %s189
      %s193 = sphi 0, %s192
      %s209 = sphi 0, %s193
      %s215 = sphi 0, %s217
      %s218 = sphi 0, %s215
      %s219 = sphi 0, %s218
      %s235 = sphi 0, %s219
      %s243 = sphi 0, %s245
      %s246 = sphi 0, %s243
      %s247 = sphi 0, %s246
      %s263 = sphi 0, %s247
    $region4: #{sae_forward.1} parent=1 // loop_header_branch
      %18 = sbr.rel (%p16) target = $region8
    $region5: #{sae_forward.1} parent=1 // loop_body
      %s20 = ssub.s32 %s15, 1
      %s21 = ssub.s32 %s15, 2
      %s28 = sadd.s32 1, %s23
      %p29 = scmp.ge.s32.totalorder %s28, 3
      %s30 = scalar_select %p29, 0, %s28
      %s31 = sadd.s32 1, %s22
      %s32 = scalar_select %p29, %s31, %s22
      %p33 = scmp.ge.s32.totalorder %s32, 2
      %s34 = scalar_select %p33, 0, %s32
      %s35 = ssub.s32 %s22, %s34
      %p36 = scmp.eq.s32.totalorder %s35, 0
      %s38 = sadd.s32 %s37, 1
      %s39 = scalar_select %p36, %s37, %s38
      %p42 = pneg %p36
      %p43 = scmp.eq.s32.totalorder %s15, 5
      %p44 = por %p42, %p43
      %p45 = scmp.ne.s32.totalorder %s37, %s40
      %p46 = scmp.eq.s32.totalorder %s15, 0
      %p47 = por %p45, %p46
      %p48 = scmp.ne.s32.totalorder %s37, %s40
      %p49 = scmp.eq.s32.totalorder %s20, 5
      %p50 = por %p48, %p49
      %p51 = scmp.ne.s32.totalorder %s40, %s41
      %p52 = scmp.eq.s32.totalorder %s20, 0
      %p53 = por %p51, %p52
      %p54 = scmp.ne.s32.totalorder %s40, %s41
      %p55 = scmp.eq.s32.totalorder %s21, 5
      %p56 = por %p54, %p55
      %p58 = scmp.ne.s32.totalorder %s41, %s57
      %p59 = scmp.eq.s32.totalorder %s21, 0
      %p60 = por %p58, %p59
      %s62 = sadd.s32 %s61, 1
      %p65 = scmp.eq.s32.totalorder %s15, 5
      %p66 = scmp.ne.s32.totalorder %s61, %s63
      %p67 = scmp.eq.s32.totalorder %s15, 0
      %p68 = por %p66, %p67
      %p69 = scmp.ne.s32.totalorder %s61, %s63
      %p70 = scmp.eq.s32.totalorder %s20, 5
      %p71 = por %p69, %p70
      %p72 = scmp.ne.s32.totalorder %s63, %s64
      %p73 = scmp.eq.s32.totalorder %s20, 0
      %p74 = por %p72, %p73
      %p75 = scmp.ne.s32.totalorder %s63, %s64
      %p76 = scmp.eq.s32.totalorder %s21, 5
      %p77 = por %p75, %p76
      %p79 = scmp.ne.s32.totalorder %s64, %s78
      %p80 = scmp.eq.s32.totalorder %s21, 0
      %p81 = por %p79, %p80
      %s83 = sadd.s32 %s82, 1
      %p86 = scmp.eq.s32.totalorder %s15, 5
      %p87 = scmp.ne.s32.totalorder %s82, %s84
      %p88 = scmp.eq.s32.totalorder %s15, 0
      %p89 = por %p87, %p88
      %p90 = scmp.ne.s32.totalorder %s82, %s84
      %p91 = scmp.eq.s32.totalorder %s20, 5
      %p92 = por %p90, %p91
      %p93 = scmp.ne.s32.totalorder %s84, %s85
      %p94 = scmp.eq.s32.totalorder %s20, 0
      %p95 = por %p93, %p94
      %p96 = scmp.ne.s32.totalorder %s84, %s85
      %p97 = scmp.eq.s32.totalorder %s21, 5
      %p98 = por %p96, %p97
      %p100 = scmp.ne.s32.totalorder %s85, %s99
      %p101 = scmp.eq.s32.totalorder %s21, 0
      %p102 = por %p100, %p101
      %s104 = sadd.s32 %s103, 1
      %p107 = scmp.eq.s32.totalorder %s15, 5
      %p108 = scmp.ne.s32.totalorder %s103, %s105
      %p109 = scmp.eq.s32.totalorder %s15, 0
      %p110 = por %p108, %p109
      %p111 = scmp.ne.s32.totalorder %s103, %s105
      %p112 = scmp.eq.s32.totalorder %s20, 5
      %p113 = por %p111, %p112
      %p114 = scmp.ne.s32.totalorder %s105, %s106
      %p115 = scmp.eq.s32.totalorder %s20, 0
      %p116 = por %p114, %p115
      %p117 = scmp.ne.s32.totalorder %s105, %s106
      %p118 = scmp.eq.s32.totalorder %s21, 5
      %p119 = por %p117, %p118
      %p121 = scmp.ne.s32.totalorder %s106, %s120
      %p122 = scmp.eq.s32.totalorder %s21, 0
      %p123 = por %p121, %p122
      %s125 = sadd.s32 %s124, 1
      %p128 = scmp.eq.s32.totalorder %s15, 5
      %p129 = scmp.ne.s32.totalorder %s124, %s126
      %p130 = scmp.eq.s32.totalorder %s15, 0
      %p131 = por %p129, %p130
      %p132 = scmp.ne.s32.totalorder %s124, %s126
      %p133 = scmp.eq.s32.totalorder %s20, 5
      %p134 = por %p132, %p133
      %p135 = scmp.ne.s32.totalorder %s126, %s127
      %p136 = scmp.eq.s32.totalorder %s20, 0
      %p137 = por %p135, %p136
      %p138 = scmp.ne.s32.totalorder %s126, %s127
      %p139 = scmp.eq.s32.totalorder %s21, 5
      %p140 = por %p138, %p139
      %p142 = scmp.ne.s32.totalorder %s127, %s141
      %p143 = scmp.eq.s32.totalorder %s21, 0
      %p144 = por %p142, %p143
      %s146 = sadd.s32 %s145, 1
      %p149 = scmp.eq.s32.totalorder %s15, 5
      %p150 = scmp.ne.s32.totalorder %s145, %s147
      %p151 = scmp.eq.s32.totalorder %s15, 0
      %p152 = por %p150, %p151
      %p153 = scmp.ne.s32.totalorder %s145, %s147
      %p154 = scmp.eq.s32.totalorder %s20, 5
      %p155 = por %p153, %p154
      %p156 = scmp.ne.s32.totalorder %s147, %s148
      %p157 = scmp.eq.s32.totalorder %s20, 0
      %p158 = por %p156, %p157
      %p159 = scmp.ne.s32.totalorder %s147, %s148
      %p160 = scmp.eq.s32.totalorder %s21, 5
      %p161 = por %p159, %p160
      %p163 = scmp.ne.s32.totalorder %s148, %s162
      %p164 = scmp.eq.s32.totalorder %s21, 0
      %p165 = por %p163, %p164
      %s167 = sadd.s32 %s166, 1
      %p170 = scmp.eq.s32.totalorder %s15, 5
      %p171 = scmp.ne.s32.totalorder %s166, %s168
      %p172 = scmp.eq.s32.totalorder %s15, 0
      %p173 = por %p171, %p172
      %p174 = scmp.ne.s32.totalorder %s166, %s168
      %p175 = scmp.eq.s32.totalorder %s20, 5
      %p176 = por %p174, %p175
      %p177 = scmp.ne.s32.totalorder %s168, %s169
      %p178 = scmp.eq.s32.totalorder %s20, 0
      %p179 = por %p177, %p178
      %p180 = scmp.ne.s32.totalorder %s168, %s169
      %p181 = scmp.eq.s32.totalorder %s21, 5
      %p182 = por %p180, %p181
      %p184 = scmp.ne.s32.totalorder %s169, %s183
      %p185 = scmp.eq.s32.totalorder %s21, 0
      %p186 = por %p184, %p185
      %s187 = ssub.s32 %s23, %s30
      %p188 = scmp.eq.s32.totalorder %s187, 0
      %s190 = sadd.s32 %s189, 1
      %s191 = scalar_select %p188, %s189, %s190
      %p194 = pneg %p188
      %p195 = scmp.eq.s32.totalorder %s15, 5
      %p196 = por %p194, %p195
      %p197 = scmp.ne.s32.totalorder %s189, %s192
      %p198 = scmp.eq.s32.totalorder %s15, 0
      %p199 = por %p197, %p198
      %p200 = scmp.ne.s32.totalorder %s189, %s192
      %p201 = scmp.eq.s32.totalorder %s20, 5
      %p202 = por %p200, %p201
      %p203 = scmp.ne.s32.totalorder %s192, %s193
      %p204 = scmp.eq.s32.totalorder %s20, 0
      %p205 = por %p203, %p204
      %p206 = scmp.ne.s32.totalorder %s192, %s193
      %p207 = scmp.eq.s32.totalorder %s21, 5
      %p208 = por %p206, %p207
      %p210 = scmp.ne.s32.totalorder %s193, %s209
      %p211 = scmp.eq.s32.totalorder %s21, 0
      %p212 = por %p210, %p211
      %s213 = ssub.s32 %s23, %s30
      %p214 = scmp.eq.s32.totalorder %s213, 0
      %s216 = sadd.s32 %s215, 1
      %s217 = scalar_select %p214, %s215, %s216
      %p220 = pneg %p214
      %p221 = scmp.eq.s32.totalorder %s15, 5
      %p222 = por %p220, %p221
      %p223 = scmp.ne.s32.totalorder %s215, %s218
      %p224 = scmp.eq.s32.totalorder %s15, 0
      %p225 = por %p223, %p224
      %p226 = scmp.ne.s32.totalorder %s215, %s218
      %p227 = scmp.eq.s32.totalorder %s20, 5
      %p228 = por %p226, %p227
      %p229 = scmp.ne.s32.totalorder %s218, %s219
      %p230 = scmp.eq.s32.totalorder %s20, 0
      %p231 = por %p229, %p230
      %p232 = scmp.ne.s32.totalorder %s218, %s219
      %p233 = scmp.eq.s32.totalorder %s21, 5
      %p234 = por %p232, %p233
      %p236 = scmp.ne.s32.totalorder %s219, %s235
      %p237 = scmp.eq.s32.totalorder %s21, 0
      %p238 = por %p236, %p237
      %s239 = ssub.s32 %s22, %s34
      %s240 = ssub.s32 %s23, %s30
      %s241 = sor.u32 %s239, %s240
      %p242 = scmp.eq.s32.totalorder %s241, 0
      %s244 = sadd.s32 %s243, 1
      %s245 = scalar_select %p242, %s243, %s244
      %p248 = pneg %p242
      %p249 = scmp.eq.s32.totalorder %s15, 5
      %p250 = por %p248, %p249
      %p251 = scmp.ne.s32.totalorder %s243, %s246
      %p252 = scmp.eq.s32.totalorder %s15, 0
      %p253 = por %p251, %p252
      %p254 = scmp.ne.s32.totalorder %s243, %s246
      %p255 = scmp.eq.s32.totalorder %s20, 5
      %p256 = por %p254, %p255
      %p257 = scmp.ne.s32.totalorder %s246, %s247
      %p258 = scmp.eq.s32.totalorder %s20, 0
      %p259 = por %p257, %p258
      %p260 = scmp.ne.s32.totalorder %s246, %s247
      %p261 = scmp.eq.s32.totalorder %s21, 5
      %p262 = por %p260, %p261
      %p264 = scmp.ne.s32.totalorder %s247, %s263
      %p265 = scmp.eq.s32.totalorder %s21, 0
      %p266 = por %p264, %p265
      %p267 = scmp.le.s32.totalorder 1, %s15
      %p268 = scmp.lt.s32.totalorder %s15, 7
      %p269 = pnand %p267, %p268
      %p270 = pneg %p269
      // Predicated region
      $region9: #{sae_forward.1} parent=5 // pred_check
        _
      $region10: #{sae_forward.1} parent=5 // pred_check_branch
        %272 = sbr.rel (%p269) target = $region12
      $region11: #{sae_forward.1} parent=5 // pred_region
        %s273 = ssub.s32 %s15, 1
        // Predicated region
        $region13: #{sae_forward.1} parent=11 // pred_check
          %p274 = pneg %p74
        $region14: #{sae_forward.1} parent=11 // pred_check_branch
          %276 = sbr.rel (%p274) target = $region16
        $region15: #{sae_forward.1} parent=11 // pred_region
          _
        $region16: #{sae_forward.1} parent=11 // pred_fallthru
          _
        // Predicated region
        $region17: #{sae_forward.1} parent=11 // pred_check
          %p277 = pneg %p95
        $region18: #{sae_forward.1} parent=11 // pred_check_branch
          %279 = sbr.rel (%p277) target = $region20
        $region19: #{sae_forward.1} parent=11 // pred_region
          _
        $region20: #{sae_forward.1} parent=11 // pred_fallthru
          _
        // Predicated region
        $region21: #{sae_forward.1} parent=11 // pred_check
          %p280 = pneg %p116
        $region22: #{sae_forward.1} parent=11 // pred_check_branch
          %282 = sbr.rel (%p280) target = $region24
        $region23: #{sae_forward.1} parent=11 // pred_region
          _
        $region24: #{sae_forward.1} parent=11 // pred_fallthru
          _
        // Predicated region
        $region25: #{sae_forward.1} parent=11 // pred_check
          %p283 = pneg %p137
        $region26: #{sae_forward.1} parent=11 // pred_check_branch
          %285 = sbr.rel (%p283) target = $region28
        $region27: #{sae_forward.1} parent=11 // pred_region
          _
        $region28: #{sae_forward.1} parent=11 // pred_fallthru
          _
        // Predicated region
        $region29: #{sae_forward.1} parent=11 // pred_check
          %p286 = pneg %p158
        $region30: #{sae_forward.1} parent=11 // pred_check_branch
          %288 = sbr.rel (%p286) target = $region32
        $region31: #{sae_forward.1} parent=11 // pred_region
          _
        $region32: #{sae_forward.1} parent=11 // pred_fallthru
          _
        // Predicated region
        $region33: #{sae_forward.1} parent=11 // pred_check
          %p289 = pneg %p179
        $region34: #{sae_forward.1} parent=11 // pred_check_branch
          %291 = sbr.rel (%p289) target = $region36
        $region35: #{sae_forward.1} parent=11 // pred_region
          _
        $region36: #{sae_forward.1} parent=11 // pred_fallthru
          _
      $region12: #{sae_forward.1} parent=5 // pred_fallthru
        _
      %p292 = scmp.lt.s32.totalorder %s15, 6
      // Predicated region
      $region37: #{sae_forward.1} parent=5 // pred_check
        %p293 = pneg %p292
      $region38: #{sae_forward.1} parent=5 // pred_check_branch
        %295 = sbr.rel (%p293) target = $region40
      $region39: #{sae_forward.1} parent=5 // pred_region
        // Predicated region
        $region41: #{sae_forward.1} parent=39 // pred_check
          %p296 = pneg %p47
        $region42: #{sae_forward.1} parent=39 // pred_check_branch
          %298 = sbr.rel (%p296) target = $region44
        $region43: #{sae_forward.1} parent=39 // pred_region
          %s299 = smul.u32 16, %s22
          %p300 = scmp.lt.s32.totalorder %s299, 31
          %s301 = scalar_select %p300, %s299, 31
          %s302 = smul.addr %s301, 10
          %s303 = smul.addr %s302, 4
          %s304 = scalar_lea.vmem %s0, %s303
          %s305 = smul.u32 16, %s22
        $region44: #{sae_forward.1} parent=39 // pred_fallthru
          _
        // Predicated region
        $region45: #{sae_forward.1} parent=39 // pred_check
          %p306 = pneg %p199
        $region46: #{sae_forward.1} parent=39 // pred_check_branch
          %308 = sbr.rel (%p306) target = $region48
        $region47: #{sae_forward.1} parent=39 // pred_region
          %s309 = sand.u32 %s189, 1
          %s310 = sand.u32 %s189, 1
          %s311 = smul.addr %s310, 48
          %s312 = scalar_lea.vmem [#allocation3], %s311
          %s313 = smul.u32 4, %s23
          %s314 = smul.addr %s313, 4
          %s315 = scalar_lea.vmem %s7, %s314
          // Predicated region
          $region49: #{sae_forward.1} parent=47 // pred_check
            _
          $region50: #{sae_forward.1} parent=47 // pred_check_branch
            %317 = sbr.rel (0) target = $region52
          $region51: #{sae_forward.1} parent=47 // pred_region
            // Predicated region
            $region53: #{sae_forward.1} parent=51 // pred_check
              _
            $region54: #{sae_forward.1} parent=51 // pred_check_branch
              %319 = sbr.rel (0) target = $region56
            $region55: #{sae_forward.1} parent=51 // pred_region
              loop: start=0, step=1, limit=1
              $region57: #{sae_forward.1} parent=55 // loop_pre_header
                _
              $region58: #{sae_forward.1} parent=55 // loop_header
                %s321 = sphi 0, %s325
                %p322 = scmp.ge.s32.totalorder %s321, 1
                %s326 = sphi %s315, %s315
                %s327 = sphi %s312, %s312
              $region59: #{sae_forward.1} parent=55 // loop_header_branch
                %324 = sbr.rel (%p322) target = $region63
              $region60: #{sae_forward.1} parent=55 // loop_body
                %v328 = vld [vmem:[%s326] sm:$0xff]
                %329 = vst [vmem:[%s327] sm:$0xff] %v328
                %v330 = vld [vmem:[%s326 + $0x8] sm:$0xff]
                %331 = vst [vmem:[%s327 + $0x8] sm:$0xff] %v330
                %v332 = vld [vmem:[%s326 + $0x30] sm:$0xff]
                %333 = vst [vmem:[%s327 + $0x10] sm:$0xff] %v332
                %v334 = vld [vmem:[%s326 + $0x38] sm:$0xff]
                %335 = vst [vmem:[%s327 + $0x18] sm:$0xff] %v334
                %v336 = vld [vmem:[%s326 + $0x60] sm:$0xff]
                %337 = vst [vmem:[%s327 + $0x20] sm:$0xff] %v336
                %v338 = vld [vmem:[%s326 + $0x68] sm:$0xff]
                %339 = vst [vmem:[%s327 + $0x28] sm:$0xff] %v338
              $region61: #{sae_forward.1} parent=55 // loop_footer
                %s325 = sadd.s32 1, %s321
              $region62: #{sae_forward.1} parent=55 // loop_footer_branch
                %320 = sbr.rel target = $region58
              $region63: #{sae_forward.1} parent=55 // loop_exit
                _
            $region56: #{sae_forward.1} parent=51 // pred_fallthru
              _
            // Predicated region
            $region64: #{sae_forward.1} parent=51 // pred_check
              _
            $region65: #{sae_forward.1} parent=51 // pred_check_branch
              %341 = sbr.rel target = $region67
            $region66: #{sae_forward.1} parent=51 // pred_region
              _
            $region67: #{sae_forward.1} parent=51 // pred_fallthru
              _
          $region52: #{sae_forward.1} parent=47 // pred_fallthru
            _
          %342 = vnop
        $region48: #{sae_forward.1} parent=39 // pred_fallthru
          _
        // Predicated region
        $region68: #{sae_forward.1} parent=39 // pred_check
          %p343 = pneg %p225
        $region69: #{sae_forward.1} parent=39 // pred_check_branch
          %345 = sbr.rel (%p343) target = $region71
        $region70: #{sae_forward.1} parent=39 // pred_region
          %s346 = smul.u32 4, %s23
          %p347 = scmp.lt.s32.totalorder %s346, 11
          %s348 = scalar_select %p347, %s346, 11
          %s349 = scalar_lea.vmem %s8, %s348
          %s350 = smul.u32 4, %s23
        $region71: #{sae_forward.1} parent=39 // pred_fallthru
          _
      $region40: #{sae_forward.1} parent=5 // pred_fallthru
        _
      %p351 = scmp.le.s32.totalorder 1, %s15
      %p352 = scmp.lt.s32.totalorder %s15, 7
      %p353 = pnand %p351, %p352
      %p354 = pneg %p353
      // Predicated region
      $region72: #{sae_forward.1} parent=5 // pred_check
        _
      $region73: #{sae_forward.1} parent=5 // pred_check_branch
        %356 = sbr.rel (%p353) target = $region75
      $region74: #{sae_forward.1} parent=5 // pred_region
        %s357 = ssub.s32 %s15, 1
        %s358 = sand.u32 %s192, 1
        %s359 = sand.u32 %s192, 1
        %s360 = smul.addr %s359, 48
        %s361 = scalar_lea.vmem [#allocation3], %s360
        // Predicated region
        $region76: #{sae_forward.1} parent=74 // pred_check
          %p362 = pneg %p205
        $region77: #{sae_forward.1} parent=74 // pred_check_branch
          %364 = sbr.rel (%p362) target = $region79
        $region78: #{sae_forward.1} parent=74 // pred_region
          _
        $region79: #{sae_forward.1} parent=74 // pred_fallthru
          _
        %s365 = smul.u32 16, %s24
        %p366 = scmp.lt.s32.totalorder %s365, 31
        %s367 = scalar_select %p366, %s365, 31
        %s368 = smul.addr %s367, 10
        %s369 = smul.addr %s368, 4
        %s370 = scalar_lea.vmem %s0, %s369
        %p371 = pneg %p53
        %p372 = pneg %p50
        %p373 = pneg %p74
        %p374 = pneg %p71
        %p375 = pneg %p95
        %p376 = pneg %p92
        %p377 = pneg %p116
        %p378 = pneg %p113
        %p379 = pneg %p137
        %p380 = pneg %p134
        %p381 = pneg %p158
        %p382 = pneg %p155
        %p383 = pneg %p179
        %p384 = pneg %p176
        %s385 = sand.u32 %s192, 1
        %s386 = sand.u32 %s192, 1
        %s387 = smul.addr %s386, 48
        %s388 = scalar_lea.vmem [#allocation3], %s387
        %p389 = pneg %p205
        %p390 = pneg %p202
        %s391 = smul.u32 4, %s25
        %p392 = scmp.lt.s32.totalorder %s391, 11
        %s393 = scalar_select %p392, %s391, 11
        %s394 = scalar_lea.vmem %s8, %s393
        %p395 = pneg %p231
        %p396 = pneg %p228
        %p397 = pneg %p259
        %p398 = pneg %p256
        %s399 = sand.u32 %s246, 1
        %s400 = sand.u32 %s246, 1
        %s401 = smul.addr %s400, 512
        %s402 = scalar_lea.vmem [#allocation4], %s401
        %s403 = smul.u32 16, %s24
        %p404 = scmp.lt.s32.totalorder %s403, 31
        %s405 = scalar_select %p404, %s403, 31
        %s406 = smul.addr %s405, 10
        %s407 = smul.addr %s406, 4
        %s408 = scalar_lea.vmem %s0, %s407
        %s409 = smul.u32 16, %s24
        %s410 = smul.u32 4, %s25
        %s411 = smul.u32 4, %s25
        %p412 = scmp.lt.s32.totalorder %s411, 11
        %s413 = scalar_select %p412, %s411, 11
        %s414 = scalar_lea.vmem %s8, %s413
        %s415 = smul.u32 4, %s25
        %s416 = smul.u32 16, %s24
        %s417 = smul.u32 4, %s25
        %p419 = scmp.eq.s32.totalorder %s25, 0
        // Predicated region
        $region80: #{sae_forward.1} parent=74 // pred_check
          %p420 = pneg %p419
        $region81: #{sae_forward.1} parent=74 // pred_check_branch
          %422 = sbr.rel (%p420) target = $region83
        $region82: #{sae_forward.1} parent=74 // pred_region
          %v423 = vld [vmem:[%s408] sm:$0xff]
          %v424 = vld [vmem:[%s408 + $0x8] sm:$0xff]
          %v425 = vld [vmem:[%s408 + $0x10] sm:$0xff]
          %v426 = vld [vmem:[%s408 + $0x18] sm:$0xff]
          %v427 = vld [vmem:[%s408 + $0x20] sm:$0xff]
          %v428 = vld [vmem:[%s408 + $0x28] sm:$0xff]
          %v429 = vld [vmem:[%s408 + $0x30] sm:$0xff]
          %v430 = vld [vmem:[%s408 + $0x38] sm:$0xff]
          %v431 = vld [vmem:[%s408 + $0x40] sm:$0xff]
          %v432 = vld [vmem:[%s408 + $0x48] sm:$0xff]
          %v433 = vld [vmem:[%s408 + $0x50] sm:$0xff]
          %v434 = vld [vmem:[%s408 + $0x58] sm:$0xff]
          %v435 = vld [vmem:[%s408 + $0x60] sm:$0xff]
          %v436 = vld [vmem:[%s408 + $0x68] sm:$0xff]
          %v437 = vld [vmem:[%s408 + $0x70] sm:$0xff]
          %v438 = vld [vmem:[%s408 + $0x78] sm:$0xff]
          %v439 = vld [vmem:[%s408 + $0x80] sm:$0xff]
          %v440 = vld [vmem:[%s408 + $0x88] sm:$0xff]
          %v441 = vld [vmem:[%s408 + $0x90] sm:$0xff]
          %v442 = vld [vmem:[%s408 + $0x98] sm:$0xff]
          %v443 = vld [vmem:[%s408 + $0xa0] sm:$0xff]
          %v444 = vld [vmem:[%s408 + $0xa8] sm:$0xff]
          %v445 = vld [vmem:[%s408 + $0xb0] sm:$0xff]
          %v446 = vld [vmem:[%s408 + $0xb8] sm:$0xff]
          %v447 = vld [vmem:[%s408 + $0xc0] sm:$0xff]
          %v448 = vld [vmem:[%s408 + $0xc8] sm:$0xff]
          %v449 = vld [vmem:[%s408 + $0xd0] sm:$0xff]
          %v450 = vld [vmem:[%s408 + $0xd8] sm:$0xff]
          %v451 = vld [vmem:[%s408 + $0xe0] sm:$0xff]
          %v452 = vld [vmem:[%s408 + $0xe8] sm:$0xff]
          %v453 = vld [vmem:[%s408 + $0xf0] sm:$0xff]
          %v454 = vld [vmem:[%s408 + $0xf8] sm:$0xff]
          %v455 = vld [vmem:[%s408 + $0x100] sm:$0xff]
          %v456 = vld [vmem:[%s408 + $0x108] sm:$0xff]
          %v457 = vld [vmem:[%s408 + $0x110] sm:$0xff]
          %v458 = vld [vmem:[%s408 + $0x118] sm:$0xff]
          %v459 = vld [vmem:[%s408 + $0x120] sm:$0xff]
          %v460 = vld [vmem:[%s408 + $0x128] sm:$0xff]
          %v461 = vld [vmem:[%s408 + $0x130] sm:$0xff]
          %v462 = vld [vmem:[%s408 + $0x138] sm:$0xff]
          %v463 = vld [vmem:[%s408 + $0x140] sm:$0xff]
          %v464 = vld [vmem:[%s408 + $0x148] sm:$0xff]
          %v465 = vld [vmem:[%s408 + $0x150] sm:$0xff]
          %v466 = vld [vmem:[%s408 + $0x158] sm:$0xff]
          %v467 = vld [vmem:[%s408 + $0x160] sm:$0xff]
          %v468 = vld [vmem:[%s408 + $0x168] sm:$0xff]
          %v469 = vld [vmem:[%s408 + $0x170] sm:$0xff]
          %v470 = vld [vmem:[%s408 + $0x178] sm:$0xff]
          %v471 = vld [vmem:[%s408 + $0x180] sm:$0xff]
          %v472 = vld [vmem:[%s408 + $0x188] sm:$0xff]
          %v473 = vld [vmem:[%s408 + $0x190] sm:$0xff]
          %v474 = vld [vmem:[%s408 + $0x198] sm:$0xff]
          %v475 = vld [vmem:[%s408 + $0x1a0] sm:$0xff]
          %v476 = vld [vmem:[%s408 + $0x1a8] sm:$0xff]
          %v477 = vld [vmem:[%s408 + $0x1b0] sm:$0xff]
          %v478 = vld [vmem:[%s408 + $0x1b8] sm:$0xff]
          %v479 = vld [vmem:[%s408 + $0x1c0] sm:$0xff]
          %v480 = vld [vmem:[%s408 + $0x1c8] sm:$0xff]
          %v481 = vld [vmem:[%s408 + $0x1d0] sm:$0xff]
          %v482 = vld [vmem:[%s408 + $0x1d8] sm:$0xff]
          %v483 = vld [vmem:[%s408 + $0x1e0] sm:$0xff]
          %v484 = vld [vmem:[%s408 + $0x1e8] sm:$0xff]
          %v485 = vld [vmem:[%s408 + $0x1f0] sm:$0xff]
          %v486 = vld [vmem:[%s408 + $0x1f8] sm:$0xff]
          %v487 = vld [vmem:[%s408 + $0x200] sm:$0xff]
          %v488 = vld [vmem:[%s408 + $0x208] sm:$0xff]
          %v489 = vld [vmem:[%s408 + $0x210] sm:$0xff]
          %v490 = vld [vmem:[%s408 + $0x218] sm:$0xff]
          %v491 = vld [vmem:[%s408 + $0x220] sm:$0xff]
          %v492 = vld [vmem:[%s408 + $0x228] sm:$0xff]
          %v493 = vld [vmem:[%s408 + $0x230] sm:$0xff]
          %v494 = vld [vmem:[%s408 + $0x238] sm:$0xff]
          %v495 = vld [vmem:[%s408 + $0x240] sm:$0xff]
          %v496 = vld [vmem:[%s408 + $0x248] sm:$0xff]
          %v497 = vld [vmem:[%s408 + $0x250] sm:$0xff]
          %v498 = vld [vmem:[%s408 + $0x258] sm:$0xff]
          %v499 = vld [vmem:[%s408 + $0x260] sm:$0xff]
          %v500 = vld [vmem:[%s408 + $0x268] sm:$0xff]
          %v501 = vld [vmem:[%s408 + $0x270] sm:$0xff]
          %v502 = vld [vmem:[%s408 + $0x278] sm:$0xff]
          %v503 = vld [vmem:[%s1] sm:$0xff]
          %v504 = vld [vmem:[%s1 + $0x8] sm:$0xff]
          %v505 = vld [vmem:[%s1 + $0x10] sm:$0xff]
          %v506 = vld [vmem:[%s1 + $0x18] sm:$0xff]
          %v507 = vld [vmem:[%s1 + $0x20] sm:$0xff]
          %v508 = vld [vmem:[%s1 + $0x28] sm:$0xff]
          %v509 = vld [vmem:[%s1 + $0x30] sm:$0xff]
          %v510 = vld [vmem:[%s1 + $0x38] sm:$0xff]
          %v511 = vld [vmem:[%s1 + $0x40] sm:$0xff]
          %v512 = vld [vmem:[%s1 + $0x48] sm:$0xff]
          %v513 = vld [vmem:[%s1 + $0x50] sm:$0x33]
          %v514 = vld [vmem:[%s1 + $0x58] sm:$0x33]
          %v515 = vld [vmem:[%s1 + $0x60] sm:$0x33]
          %v516 = vld [vmem:[%s1 + $0x68] sm:$0x33]
          %v517 = vld [vmem:[%s1 + $0x70] sm:$0x33]
          %v518 = vld [vmem:[%s2] sm:$0x1]
          %v520 = vlaneseq
          %v521 = vshrl.u32 %v520, 7
          %v522 = vsub.s32 0, %v521
          %v523 = vrot.slane %v518, %v522
          %v605 = vunpack.c.l.b16 %v423
          %v606 = vunpack.c.h.b16 %v423
          %v607 = vunpack.c.l.b16 %v424
          %v608 = vunpack.c.h.b16 %v424
          %v609 = vunpack.c.l.b16 %v425
          %v610 = vunpack.c.h.b16 %v425
          %v611 = vunpack.c.l.b16 %v426
          %v612 = vunpack.c.h.b16 %v426
          %v613 = vunpack.c.l.b16 %v427
          %v614 = vunpack.c.h.b16 %v427
          %v615 = vunpack.c.l.b16 %v428
          %v616 = vunpack.c.h.b16 %v428
          %v617 = vunpack.c.l.b16 %v429
          %v618 = vunpack.c.h.b16 %v429
          %v619 = vunpack.c.l.b16 %v430
          %v620 = vunpack.c.h.b16 %v430
          %v621 = vunpack.c.l.b16 %v431
          %v622 = vunpack.c.h.b16 %v431
          %v623 = vunpack.c.l.b16 %v432
          %v624 = vunpack.c.h.b16 %v432
          %v625 = vunpack.c.l.b16 %v433
          %v626 = vunpack.c.h.b16 %v433
          %v627 = vunpack.c.l.b16 %v434
          %v628 = vunpack.c.h.b16 %v434
          %v629 = vunpack.c.l.b16 %v435
          %v630 = vunpack.c.h.b16 %v435
          %v631 = vunpack.c.l.b16 %v436
          %v632 = vunpack.c.h.b16 %v436
          %v633 = vunpack.c.l.b16 %v437
          %v634 = vunpack.c.h.b16 %v437
          %v635 = vunpack.c.l.b16 %v438
          %v636 = vunpack.c.h.b16 %v438
          %v637 = vunpack.c.l.b16 %v439
          %v638 = vunpack.c.h.b16 %v439
          %v639 = vunpack.c.l.b16 %v440
          %v640 = vunpack.c.h.b16 %v440
          %v641 = vunpack.c.l.b16 %v441
          %v642 = vunpack.c.h.b16 %v441
          %v643 = vunpack.c.l.b16 %v442
          %v644 = vunpack.c.h.b16 %v442
          %v645 = vunpack.c.l.b16 %v443
          %v646 = vunpack.c.h.b16 %v443
          %v647 = vunpack.c.l.b16 %v444
          %v648 = vunpack.c.h.b16 %v444
          %v649 = vunpack.c.l.b16 %v445
          %v650 = vunpack.c.h.b16 %v445
          %v651 = vunpack.c.l.b16 %v446
          %v652 = vunpack.c.h.b16 %v446
          %v653 = vunpack.c.l.b16 %v447
          %v654 = vunpack.c.h.b16 %v447
          %v655 = vunpack.c.l.b16 %v448
          %v656 = vunpack.c.h.b16 %v448
          %v657 = vunpack.c.l.b16 %v449
          %v658 = vunpack.c.h.b16 %v449
          %v659 = vunpack.c.l.b16 %v450
          %v660 = vunpack.c.h.b16 %v450
          %v661 = vunpack.c.l.b16 %v451
          %v662 = vunpack.c.h.b16 %v451
          %v663 = vunpack.c.l.b16 %v452
          %v664 = vunpack.c.h.b16 %v452
          %v665 = vunpack.c.l.b16 %v453
          %v666 = vunpack.c.h.b16 %v453
          %v667 = vunpack.c.l.b16 %v454
          %v668 = vunpack.c.h.b16 %v454
          %v669 = vunpack.c.l.b16 %v455
          %v670 = vunpack.c.h.b16 %v455
          %v671 = vunpack.c.l.b16 %v456
          %v672 = vunpack.c.h.b16 %v456
          %v673 = vunpack.c.l.b16 %v457
          %v674 = vunpack.c.h.b16 %v457
          %v675 = vunpack.c.l.b16 %v458
          %v676 = vunpack.c.h.b16 %v458
          %v677 = vunpack.c.l.b16 %v459
          %v678 = vunpack.c.h.b16 %v459
          %v679 = vunpack.c.l.b16 %v460
          %v680 = vunpack.c.h.b16 %v460
          %v681 = vunpack.c.l.b16 %v461
          %v682 = vunpack.c.h.b16 %v461
          %v683 = vunpack.c.l.b16 %v462
          %v684 = vunpack.c.h.b16 %v462
          %v685 = vunpack.c.l.b16 %v463
          %v686 = vunpack.c.h.b16 %v463
          %v687 = vunpack.c.l.b16 %v464
          %v688 = vunpack.c.h.b16 %v464
          %v689 = vunpack.c.l.b16 %v465
          %v690 = vunpack.c.h.b16 %v465
          %v691 = vunpack.c.l.b16 %v466
          %v692 = vunpack.c.h.b16 %v466
          %v693 = vunpack.c.l.b16 %v467
          %v694 = vunpack.c.h.b16 %v467
          %v695 = vunpack.c.l.b16 %v468
          %v696 = vunpack.c.h.b16 %v468
          %v697 = vunpack.c.l.b16 %v469
          %v698 = vunpack.c.h.b16 %v469
          %v699 = vunpack.c.l.b16 %v470
          %v700 = vunpack.c.h.b16 %v470
          %v701 = vunpack.c.l.b16 %v471
          %v702 = vunpack.c.h.b16 %v471
          %v703 = vunpack.c.l.b16 %v472
          %v704 = vunpack.c.h.b16 %v472
          %v705 = vunpack.c.l.b16 %v473
          %v706 = vunpack.c.h.b16 %v473
          %v707 = vunpack.c.l.b16 %v474
          %v708 = vunpack.c.h.b16 %v474
          %v709 = vunpack.c.l.b16 %v475
          %v710 = vunpack.c.h.b16 %v475
          %v711 = vunpack.c.l.b16 %v476
          %v712 = vunpack.c.h.b16 %v476
          %v713 = vunpack.c.l.b16 %v477
          %v714 = vunpack.c.h.b16 %v477
          %v715 = vunpack.c.l.b16 %v478
          %v716 = vunpack.c.h.b16 %v478
          %v717 = vunpack.c.l.b16 %v479
          %v718 = vunpack.c.h.b16 %v479
          %v719 = vunpack.c.l.b16 %v480
          %v720 = vunpack.c.h.b16 %v480
          %v721 = vunpack.c.l.b16 %v481
          %v722 = vunpack.c.h.b16 %v481
          %v723 = vunpack.c.l.b16 %v482
          %v724 = vunpack.c.h.b16 %v482
          %v725 = vunpack.c.l.b16 %v483
          %v726 = vunpack.c.h.b16 %v483
          %v727 = vunpack.c.l.b16 %v484
          %v728 = vunpack.c.h.b16 %v484
          %v729 = vunpack.c.l.b16 %v485
          %v730 = vunpack.c.h.b16 %v485
          %v731 = vunpack.c.l.b16 %v486
          %v732 = vunpack.c.h.b16 %v486
          %v733 = vunpack.c.l.b16 %v487
          %v734 = vunpack.c.h.b16 %v487
          %v735 = vunpack.c.l.b16 %v488
          %v736 = vunpack.c.h.b16 %v488
          %v737 = vunpack.c.l.b16 %v489
          %v738 = vunpack.c.h.b16 %v489
          %v739 = vunpack.c.l.b16 %v490
          %v740 = vunpack.c.h.b16 %v490
          %v741 = vunpack.c.l.b16 %v491
          %v742 = vunpack.c.h.b16 %v491
          %v743 = vunpack.c.l.b16 %v492
          %v744 = vunpack.c.h.b16 %v492
          %v745 = vunpack.c.l.b16 %v493
          %v746 = vunpack.c.h.b16 %v493
          %v747 = vunpack.c.l.b16 %v494
          %v748 = vunpack.c.h.b16 %v494
          %v749 = vunpack.c.l.b16 %v495
          %v750 = vunpack.c.h.b16 %v495
          %v751 = vunpack.c.l.b16 %v496
          %v752 = vunpack.c.h.b16 %v496
          %v753 = vunpack.c.l.b16 %v497
          %v754 = vunpack.c.h.b16 %v497
          %v755 = vunpack.c.l.b16 %v498
          %v756 = vunpack.c.h.b16 %v498
          %v757 = vunpack.c.l.b16 %v499
          %v758 = vunpack.c.h.b16 %v499
          %v759 = vunpack.c.l.b16 %v500
          %v760 = vunpack.c.h.b16 %v500
          %v761 = vunpack.c.l.b16 %v501
          %v762 = vunpack.c.h.b16 %v501
          %v763 = vunpack.c.l.b16 %v502
          %v764 = vunpack.c.h.b16 %v502
          %v765 = vpack.c.b16 %v615, %v605
          %v766 = vpack.c.b16 %v616, %v606
          %v767 = vpack.c.b16 %v617, %v607
          %v768 = vpack.c.b16 %v618, %v608
          %v769 = vpack.c.b16 %v619, %v609
          %v770 = vpack.c.b16 %v620, %v610
          %v771 = vpack.c.b16 %v621, %v611
          %v772 = vpack.c.b16 %v622, %v612
          %v773 = vpack.c.b16 %v623, %v613
          %v774 = vpack.c.b16 %v624, %v614
          %v775 = vpack.c.b16 %v635, %v625
          %v776 = vpack.c.b16 %v636, %v626
          %v777 = vpack.c.b16 %v637, %v627
          %v778 = vpack.c.b16 %v638, %v628
          %v779 = vpack.c.b16 %v639, %v629
          %v780 = vpack.c.b16 %v640, %v630
          %v781 = vpack.c.b16 %v641, %v631
          %v782 = vpack.c.b16 %v642, %v632
          %v783 = vpack.c.b16 %v643, %v633
          %v784 = vpack.c.b16 %v644, %v634
          %v785 = vpack.c.b16 %v655, %v645
          %v786 = vpack.c.b16 %v656, %v646
          %v787 = vpack.c.b16 %v657, %v647
          %v788 = vpack.c.b16 %v658, %v648
          %v789 = vpack.c.b16 %v659, %v649
          %v790 = vpack.c.b16 %v660, %v650
          %v791 = vpack.c.b16 %v661, %v651
          %v792 = vpack.c.b16 %v662, %v652
          %v793 = vpack.c.b16 %v663, %v653
          %v794 = vpack.c.b16 %v664, %v654
          %v795 = vpack.c.b16 %v675, %v665
          %v796 = vpack.c.b16 %v676, %v666
          %v797 = vpack.c.b16 %v677, %v667
          %v798 = vpack.c.b16 %v678, %v668
          %v799 = vpack.c.b16 %v679, %v669
          %v800 = vpack.c.b16 %v680, %v670
          %v801 = vpack.c.b16 %v681, %v671
          %v802 = vpack.c.b16 %v682, %v672
          %v803 = vpack.c.b16 %v683, %v673
          %v804 = vpack.c.b16 %v684, %v674
          %v805 = vpack.c.b16 %v695, %v685
          %v806 = vpack.c.b16 %v696, %v686
          %v807 = vpack.c.b16 %v697, %v687
          %v808 = vpack.c.b16 %v698, %v688
          %v809 = vpack.c.b16 %v699, %v689
          %v810 = vpack.c.b16 %v700, %v690
          %v811 = vpack.c.b16 %v701, %v691
          %v812 = vpack.c.b16 %v702, %v692
          %v813 = vpack.c.b16 %v703, %v693
          %v814 = vpack.c.b16 %v704, %v694
          %v815 = vpack.c.b16 %v715, %v705
          %v816 = vpack.c.b16 %v716, %v706
          %v817 = vpack.c.b16 %v717, %v707
          %v818 = vpack.c.b16 %v718, %v708
          %v819 = vpack.c.b16 %v719, %v709
          %v820 = vpack.c.b16 %v720, %v710
          %v821 = vpack.c.b16 %v721, %v711
          %v822 = vpack.c.b16 %v722, %v712
          %v823 = vpack.c.b16 %v723, %v713
          %v824 = vpack.c.b16 %v724, %v714
          %v825 = vpack.c.b16 %v735, %v725
          %v826 = vpack.c.b16 %v736, %v726
          %v827 = vpack.c.b16 %v737, %v727
          %v828 = vpack.c.b16 %v738, %v728
          %v829 = vpack.c.b16 %v739, %v729
          %v830 = vpack.c.b16 %v740, %v730
          %v831 = vpack.c.b16 %v741, %v731
          %v832 = vpack.c.b16 %v742, %v732
          %v833 = vpack.c.b16 %v743, %v733
          %v834 = vpack.c.b16 %v744, %v734
          %v835 = vpack.c.b16 %v755, %v745
          %v836 = vpack.c.b16 %v756, %v746
          %v837 = vpack.c.b16 %v757, %v747
          %v838 = vpack.c.b16 %v758, %v748
          %v839 = vpack.c.b16 %v759, %v749
          %v840 = vpack.c.b16 %v760, %v750
          %v841 = vpack.c.b16 %v761, %v751
          %v842 = vpack.c.b16 %v762, %v752
          %v843 = vpack.c.b16 %v763, %v753
          %v844 = vpack.c.b16 %v764, %v754
          %v940 = vunpack.c.l.b16 %v503
          %v941 = vunpack.c.h.b16 %v503
          %v942 = vunpack.c.l.b16 %v504
          %v943 = vunpack.c.h.b16 %v504
          %v944 = vunpack.c.l.b16 %v505
          %v945 = vunpack.c.h.b16 %v505
          %v946 = vunpack.c.l.b16 %v506
          %v947 = vunpack.c.h.b16 %v506
          %v948 = vunpack.c.l.b16 %v507
          %v949 = vunpack.c.h.b16 %v507
          %v950 = vunpack.c.l.b16 %v508
          %v951 = vunpack.c.h.b16 %v508
          %v952 = vunpack.c.l.b16 %v509
          %v953 = vunpack.c.h.b16 %v509
          %v954 = vunpack.c.l.b16 %v510
          %v955 = vunpack.c.h.b16 %v510
          %v956 = vunpack.c.l.b16 %v511
          %v957 = vunpack.c.h.b16 %v511
          %v958 = vunpack.c.l.b16 %v512
          %v959 = vunpack.c.h.b16 %v512
          %v960 = vunpack.c.l.b16 %v513
          %v961 = vunpack.c.h.b16 %v513
          %v962 = vunpack.c.l.b16 %v514
          %v963 = vunpack.c.h.b16 %v514
          %v964 = vunpack.c.l.b16 %v515
          %v965 = vunpack.c.h.b16 %v515
          %v966 = vunpack.c.l.b16 %v516
          %v967 = vunpack.c.h.b16 %v516
          %v968 = vunpack.c.l.b16 %v517
          %v969 = vunpack.c.h.b16 %v517
          %v970 = vpack.c.b16 %v950, %v940
          %v971 = vpack.c.b16 %v951, %v941
          %v972 = vpack.c.b16 %v952, %v942
          %v973 = vpack.c.b16 %v953, %v943
          %v974 = vpack.c.b16 %v954, %v944
          %v975 = vpack.c.b16 %v955, %v945
          %v976 = vpack.c.b16 %v956, %v946
          %v977 = vpack.c.b16 %v957, %v947
          %v978 = vpack.c.b16 %v958, %v948
          %v979 = vpack.c.b16 %v959, %v949
          %v980 = vpack.c.b16 %v960, %v960
          %v981 = vpack.c.b16 %v961, %v961
          %v982 = vpack.c.b16 %v962, %v962
          %v983 = vpack.c.b16 %v963, %v963
          %v984 = vpack.c.b16 %v964, %v964
          %v985 = vpack.c.b16 %v965, %v965
          %v986 = vpack.c.b16 %v966, %v966
          %v987 = vpack.c.b16 %v967, %v967
          %v988 = vpack.c.b16 %v968, %v968
          %v989 = vpack.c.b16 %v969, %v969
          %1010 = vmatprep.subr.bf16.mxu0 %v971
          %1011 = vmatpush1.bf16.xpose.msra.mxu0 %v970
          %1012 = vmatprep.subr.bf16.mxu0 %v981
          %1013 = vmatpush1.bf16.xpose.msra.mxu0 %v980
          %1014 = vmatprep.subr.bf16.mxu0 0
          %1015 = vmatpush1.bf16.xpose.msra.mxu0 0
          %1016 = vmatprep.subr.bf16.mxu0 0
          %1017 = vmatpush1.bf16.xpose.msra.mxu0 0
          %1018 = vmatprep.subr.bf16.mxu0 0
          %1019 = vmatpush1.bf16.xpose.msra.mxu0 0
          %1020 = vmatprep.subr.bf16.mxu0 0
          %1021 = vmatpush1.bf16.xpose.msra.mxu0 0
          %1022 = vmatprep.subr.bf16.mxu0 0
          %1023 = vmatpush1.bf16.xpose.msra.mxu0 0
          %1024 = vmatprep.subr.bf16.mxu0 0
          %1025 = vmatpush1.bf16.xpose.msra.mxu0 0
          %1026 = vmatprep.subr.bf16.mxu0 0
          %1027 = vmatpush1.bf16.xpose.msra.mxu0 0
          %1028 = vmatprep.subr.bf16.mxu0 0
          %1029 = vmatpush1.bf16.xpose.msra.mxu0 0
          %1030 = vmatprep.subr.bf16.mxu0 0
          %1031 = vmatpush1.bf16.xpose.msra.mxu0 0
          %1032 = vmatprep.subr.bf16.mxu0 0
          %1033 = vmatpush1.bf16.xpose.msra.mxu0 0
          %1034 = vmatprep.subr.bf16.mxu0 0
          %1035 = vmatpush1.bf16.xpose.msra.mxu0 0
          %1036 = vmatprep.subr.bf16.mxu0 0
          %1037 = vmatpush1.bf16.xpose.msra.mxu0 0
          %1038 = vmatprep.subr.bf16.mxu0 0
          %1039 = vmatpush1.bf16.xpose.msra.mxu0 0
          %1040 = vmatprep.subr.bf16.mxu0 0
          %1041 = vmatpush1.bf16.xpose.msra.mxu0 0
          %1042 = vmatprep.mubr.bf16.mxu0 %v766
          %1043 = vmatmul.mubr.bf16.gmra.mrb[0].mxu0 %v765
          %v1044 = vpop.f32.mrb[0].mxu0
          %v1045 = vadd.f32 %v523, %v1044
          %v1046 = vpop.f32.mrb[0].mxu0
          %v1047 = vpop.f32.mrb[0].mxu0
          %v1048 = vadd.f32 %v523, %v1047
          %v1049 = vpop.f32.mrb[0].mxu0
          %1050 = vmatprep.mubr.bf16.mxu0 %v776
          %1051 = vmatmul.mubr.bf16.gmra.mrb[0].mxu0 %v775
          %v1052 = vpop.f32.mrb[0].mxu0
          %v1053 = vadd.f32 %v523, %v1052
          %v1054 = vpop.f32.mrb[0].mxu0
          %v1055 = vpop.f32.mrb[0].mxu0
          %v1056 = vadd.f32 %v523, %v1055
          %v1057 = vpop.f32.mrb[0].mxu0
          %1058 = vmatprep.mubr.bf16.mxu0 %v786
          %1059 = vmatmul.mubr.bf16.gmra.mrb[0].mxu0 %v785
          %v1060 = vpop.f32.mrb[0].mxu0
          %v1061 = vadd.f32 %v523, %v1060
          %v1062 = vpop.f32.mrb[0].mxu0
          %v1063 = vpop.f32.mrb[0].mxu0
          %v1064 = vadd.f32 %v523, %v1063
          %v1065 = vpop.f32.mrb[0].mxu0
          %1066 = vmatprep.mubr.bf16.mxu0 %v796
          %1067 = vmatmul.mubr.bf16.gmra.mrb[0].mxu0 %v795
          %v1068 = vpop.f32.mrb[0].mxu0
          %v1069 = vadd.f32 %v523, %v1068
          %v1070 = vpop.f32.mrb[0].mxu0
          %v1071 = vpop.f32.mrb[0].mxu0
          %v1072 = vadd.f32 %v523, %v1071
          %v1073 = vpop.f32.mrb[0].mxu0
          %1074 = vmatprep.mubr.bf16.mxu0 %v806
          %1075 = vmatmul.mubr.bf16.gmra.mrb[0].mxu0 %v805
          %v1076 = vpop.f32.mrb[0].mxu0
          %v1077 = vadd.f32 %v523, %v1076
          %v1078 = vpop.f32.mrb[0].mxu0
          %v1079 = vpop.f32.mrb[0].mxu0
          %v1080 = vadd.f32 %v523, %v1079
          %v1081 = vpop.f32.mrb[0].mxu0
          %1082 = vmatprep.mubr.bf16.mxu0 %v816
          %1083 = vmatmul.mubr.bf16.gmra.mrb[0].mxu0 %v815
          %v1084 = vpop.f32.mrb[0].mxu0
          %v1085 = vadd.f32 %v523, %v1084
          %v1086 = vpop.f32.mrb[0].mxu0
          %v1087 = vpop.f32.mrb[0].mxu0
          %v1088 = vadd.f32 %v523, %v1087
          %v1089 = vpop.f32.mrb[0].mxu0
          %1090 = vmatprep.mubr.bf16.mxu0 %v826
          %1091 = vmatmul.mubr.bf16.gmra.mrb[0].mxu0 %v825
          %v1092 = vpop.f32.mrb[0].mxu0
          %v1093 = vadd.f32 %v523, %v1092
          %v1094 = vpop.f32.mrb[0].mxu0
          %v1095 = vpop.f32.mrb[0].mxu0
          %v1096 = vadd.f32 %v523, %v1095
          %v1097 = vpop.f32.mrb[0].mxu0
          %1098 = vmatprep.mubr.bf16.mxu0 %v836
          %1099 = vmatmul.mubr.bf16.gmra.mrb[0].mxu0 %v835
          %v1100 = vpop.f32.mrb[0].mxu0
          %v1101 = vadd.f32 %v523, %v1100
          %v1102 = vpop.f32.mrb[0].mxu0
          %v1103 = vpop.f32.mrb[0].mxu0
          %v1104 = vadd.f32 %v523, %v1103
          %v1105 = vpop.f32.mrb[0].mxu0
          %1106 = vdwg.mxu0
          %1107 = vmatprep.subr.bf16.mxu0 %v973
          %1108 = vmatpush1.bf16.xpose.msra.mxu0 %v972
          %1109 = vmatprep.subr.bf16.mxu0 %v983
          %1110 = vmatpush1.bf16.xpose.msra.mxu0 %v982
          %1111 = vmatprep.subr.bf16.mxu0 0
          %1112 = vmatpush1.bf16.xpose.msra.mxu0 0
          %1113 = vmatprep.subr.bf16.mxu0 0
          %1114 = vmatpush1.bf16.xpose.msra.mxu0 0
          %1115 = vmatprep.subr.bf16.mxu0 0
          %1116 = vmatpush1.bf16.xpose.msra.mxu0 0
          %1117 = vmatprep.subr.bf16.mxu0 0
          %1118 = vmatpush1.bf16.xpose.msra.mxu0 0
          %1119 = vmatprep.subr.bf16.mxu0 0
          %1120 = vmatpush1.bf16.xpose.msra.mxu0 0
          %1121 = vmatprep.subr.bf16.mxu0 0
          %1122 = vmatpush1.bf16.xpose.msra.mxu0 0
          %1123 = vmatprep.subr.bf16.mxu0 0
          %1124 = vmatpush1.bf16.xpose.msra.mxu0 0
          %1125 = vmatprep.subr.bf16.mxu0 0
          %1126 = vmatpush1.bf16.xpose.msra.mxu0 0
          %1127 = vmatprep.subr.bf16.mxu0 0
          %1128 = vmatpush1.bf16.xpose.msra.mxu0 0
          %1129 = vmatprep.subr.bf16.mxu0 0
          %1130 = vmatpush1.bf16.xpose.msra.mxu0 0
          %1131 = vmatprep.subr.bf16.mxu0 0
          %1132 = vmatpush1.bf16.xpose.msra.mxu0 0
          %1133 = vmatprep.subr.bf16.mxu0 0
          %1134 = vmatpush1.bf16.xpose.msra.mxu0 0
          %1135 = vmatprep.subr.bf16.mxu0 0
          %1136 = vmatpush1.bf16.xpose.msra.mxu0 0
          %1137 = vmatprep.subr.bf16.mxu0 0
          %1138 = vmatpush1.bf16.xpose.msra.mxu0 0
          %1139 = vmatprep.mubr.bf16.mxu0 %v768
          %1140 = vmatmul.mubr.bf16.gmra.mrb[0].mxu0 %v767
          %v1141 = vpop.f32.mrb[0].mxu0
          %v1142 = vadd.f32 %v1045, %v1141
          %v1143 = vpop.f32.mrb[0].mxu0
          %v1144 = vpop.f32.mrb[0].mxu0
          %v1145 = vadd.f32 %v1048, %v1144
          %v1146 = vpop.f32.mrb[0].mxu0
          %1147 = vmatprep.mubr.bf16.mxu0 %v778
          %1148 = vmatmul.mubr.bf16.gmra.mrb[0].mxu0 %v777
          %v1149 = vpop.f32.mrb[0].mxu0
          %v1150 = vadd.f32 %v1053, %v1149
          %v1151 = vpop.f32.mrb[0].mxu0
          %v1152 = vpop.f32.mrb[0].mxu0
          %v1153 = vadd.f32 %v1056, %v1152
          %v1154 = vpop.f32.mrb[0].mxu0
          %1155 = vmatprep.mubr.bf16.mxu0 %v788
          %1156 = vmatmul.mubr.bf16.gmra.mrb[0].mxu0 %v787
          %v1157 = vpop.f32.mrb[0].mxu0
          %v1158 = vadd.f32 %v1061, %v1157
          %v1159 = vpop.f32.mrb[0].mxu0
          %v1160 = vpop.f32.mrb[0].mxu0
          %v1161 = vadd.f32 %v1064, %v1160
          %v1162 = vpop.f32.mrb[0].mxu0
          %1163 = vmatprep.mubr.bf16.mxu0 %v798
          %1164 = vmatmul.mubr.bf16.gmra.mrb[0].mxu0 %v797
          %v1165 = vpop.f32.mrb[0].mxu0
          %v1166 = vadd.f32 %v1069, %v1165
          %v1167 = vpop.f32.mrb[0].mxu0
          %v1168 = vpop.f32.mrb[0].mxu0
          %v1169 = vadd.f32 %v1072, %v1168
          %v1170 = vpop.f32.mrb[0].mxu0
          %1171 = vmatprep.mubr.bf16.mxu0 %v808
          %1172 = vmatmul.mubr.bf16.gmra.mrb[0].mxu0 %v807
          %v1173 = vpop.f32.mrb[0].mxu0
          %v1174 = vadd.f32 %v1077, %v1173
          %v1175 = vpop.f32.mrb[0].mxu0
          %v1176 = vpop.f32.mrb[0].mxu0
          %v1177 = vadd.f32 %v1080, %v1176
          %v1178 = vpop.f32.mrb[0].mxu0
          %1179 = vmatprep.mubr.bf16.mxu0 %v818
          %1180 = vmatmul.mubr.bf16.gmra.mrb[0].mxu0 %v817
          %v1181 = vpop.f32.mrb[0].mxu0
          %v1182 = vadd.f32 %v1085, %v1181
          %v1183 = vpop.f32.mrb[0].mxu0
          %v1184 = vpop.f32.mrb[0].mxu0
          %v1185 = vadd.f32 %v1088, %v1184
          %v1186 = vpop.f32.mrb[0].mxu0
          %1187 = vmatprep.mubr.bf16.mxu0 %v828
          %1188 = vmatmul.mubr.bf16.gmra.mrb[0].mxu0 %v827
          %v1189 = vpop.f32.mrb[0].mxu0
          %v1190 = vadd.f32 %v1093, %v1189
          %v1191 = vpop.f32.mrb[0].mxu0
          %v1192 = vpop.f32.mrb[0].mxu0
          %v1193 = vadd.f32 %v1096, %v1192
          %v1194 = vpop.f32.mrb[0].mxu0
          %1195 = vmatprep.mubr.bf16.mxu0 %v838
          %1196 = vmatmul.mubr.bf16.gmra.mrb[0].mxu0 %v837
          %v1197 = vpop.f32.mrb[0].mxu0
          %v1198 = vadd.f32 %v1101, %v1197
          %v1199 = vpop.f32.mrb[0].mxu0
          %v1200 = vpop.f32.mrb[0].mxu0
          %v1201 = vadd.f32 %v1104, %v1200
          %v1202 = vpop.f32.mrb[0].mxu0
          %1203 = vdwg.mxu0
          %1204 = vmatprep.subr.bf16.mxu0 %v975
          %1205 = vmatpush1.bf16.xpose.msra.mxu0 %v974
          %1206 = vmatprep.subr.bf16.mxu0 %v985
          %1207 = vmatpush1.bf16.xpose.msra.mxu0 %v984
          %1208 = vmatprep.subr.bf16.mxu0 0
          %1209 = vmatpush1.bf16.xpose.msra.mxu0 0
          %1210 = vmatprep.subr.bf16.mxu0 0
          %1211 = vmatpush1.bf16.xpose.msra.mxu0 0
          %1212 = vmatprep.subr.bf16.mxu0 0
          %1213 = vmatpush1.bf16.xpose.msra.mxu0 0
          %1214 = vmatprep.subr.bf16.mxu0 0
          %1215 = vmatpush1.bf16.xpose.msra.mxu0 0
          %1216 = vmatprep.subr.bf16.mxu0 0
          %1217 = vmatpush1.bf16.xpose.msra.mxu0 0
          %1218 = vmatprep.subr.bf16.mxu0 0
          %1219 = vmatpush1.bf16.xpose.msra.mxu0 0
          %1220 = vmatprep.subr.bf16.mxu0 0
          %1221 = vmatpush1.bf16.xpose.msra.mxu0 0
          %1222 = vmatprep.subr.bf16.mxu0 0
          %1223 = vmatpush1.bf16.xpose.msra.mxu0 0
          %1224 = vmatprep.subr.bf16.mxu0 0
          %1225 = vmatpush1.bf16.xpose.msra.mxu0 0
          %1226 = vmatprep.subr.bf16.mxu0 0
          %1227 = vmatpush1.bf16.xpose.msra.mxu0 0
          %1228 = vmatprep.subr.bf16.mxu0 0
          %1229 = vmatpush1.bf16.xpose.msra.mxu0 0
          %1230 = vmatprep.subr.bf16.mxu0 0
          %1231 = vmatpush1.bf16.xpose.msra.mxu0 0
          %1232 = vmatprep.subr.bf16.mxu0 0
          %1233 = vmatpush1.bf16.xpose.msra.mxu0 0
          %1234 = vmatprep.subr.bf16.mxu0 0
          %1235 = vmatpush1.bf16.xpose.msra.mxu0 0
          %1236 = vmatprep.mubr.bf16.mxu0 %v770
          %1237 = vmatmul.mubr.bf16.gmra.mrb[0].mxu0 %v769
          %v1238 = vpop.f32.mrb[0].mxu0
          %v1239 = vadd.f32 %v1142, %v1238
          %v1240 = vpop.f32.mrb[0].mxu0
          %v1241 = vpop.f32.mrb[0].mxu0
          %v1242 = vadd.f32 %v1145, %v1241
          %v1243 = vpop.f32.mrb[0].mxu0
          %1244 = vmatprep.mubr.bf16.mxu0 %v780
          %1245 = vmatmul.mubr.bf16.gmra.mrb[0].mxu0 %v779
          %v1246 = vpop.f32.mrb[0].mxu0
          %v1247 = vadd.f32 %v1150, %v1246
          %v1248 = vpop.f32.mrb[0].mxu0
          %v1249 = vpop.f32.mrb[0].mxu0
          %v1250 = vadd.f32 %v1153, %v1249
          %v1251 = vpop.f32.mrb[0].mxu0
          %1252 = vmatprep.mubr.bf16.mxu0 %v790
          %1253 = vmatmul.mubr.bf16.gmra.mrb[0].mxu0 %v789
          %v1254 = vpop.f32.mrb[0].mxu0
          %v1255 = vadd.f32 %v1158, %v1254
          %v1256 = vpop.f32.mrb[0].mxu0
          %v1257 = vpop.f32.mrb[0].mxu0
          %v1258 = vadd.f32 %v1161, %v1257
          %v1259 = vpop.f32.mrb[0].mxu0
          %1260 = vmatprep.mubr.bf16.mxu0 %v800
          %1261 = vmatmul.mubr.bf16.gmra.mrb[0].mxu0 %v799
          %v1262 = vpop.f32.mrb[0].mxu0
          %v1263 = vadd.f32 %v1166, %v1262
          %v1264 = vpop.f32.mrb[0].mxu0
          %v1265 = vpop.f32.mrb[0].mxu0
          %v1266 = vadd.f32 %v1169, %v1265
          %v1267 = vpop.f32.mrb[0].mxu0
          %1268 = vmatprep.mubr.bf16.mxu0 %v810
          %1269 = vmatmul.mubr.bf16.gmra.mrb[0].mxu0 %v809
          %v1270 = vpop.f32.mrb[0].mxu0
          %v1271 = vadd.f32 %v1174, %v1270
          %v1272 = vpop.f32.mrb[0].mxu0
          %v1273 = vpop.f32.mrb[0].mxu0
          %v1274 = vadd.f32 %v1177, %v1273
          %v1275 = vpop.f32.mrb[0].mxu0
          %1276 = vmatprep.mubr.bf16.mxu0 %v820
          %1277 = vmatmul.mubr.bf16.gmra.mrb[0].mxu0 %v819
          %v1278 = vpop.f32.mrb[0].mxu0
          %v1279 = vadd.f32 %v1182, %v1278
          %v1280 = vpop.f32.mrb[0].mxu0
          %v1281 = vpop.f32.mrb[0].mxu0
          %v1282 = vadd.f32 %v1185, %v1281
          %v1283 = vpop.f32.mrb[0].mxu0
          %1284 = vmatprep.mubr.bf16.mxu0 %v830
          %1285 = vmatmul.mubr.bf16.gmra.mrb[0].mxu0 %v829
          %v1286 = vpop.f32.mrb[0].mxu0
          %v1287 = vadd.f32 %v1190, %v1286
          %v1288 = vpop.f32.mrb[0].mxu0
          %v1289 = vpop.f32.mrb[0].mxu0
          %v1290 = vadd.f32 %v1193, %v1289
          %v1291 = vpop.f32.mrb[0].mxu0
          %1292 = vmatprep.mubr.bf16.mxu0 %v840
          %1293 = vmatmul.mubr.bf16.gmra.mrb[0].mxu0 %v839
          %v1294 = vpop.f32.mrb[0].mxu0
          %v1295 = vadd.f32 %v1198, %v1294
          %v1296 = vpop.f32.mrb[0].mxu0
          %v1297 = vpop.f32.mrb[0].mxu0
          %v1298 = vadd.f32 %v1201, %v1297
          %v1299 = vpop.f32.mrb[0].mxu0
          %1300 = vdwg.mxu0
          %1301 = vmatprep.subr.bf16.mxu0 %v977
          %1302 = vmatpush1.bf16.xpose.msra.mxu0 %v976
          %1303 = vmatprep.subr.bf16.mxu0 %v987
          %1304 = vmatpush1.bf16.xpose.msra.mxu0 %v986
          %1305 = vmatprep.subr.bf16.mxu0 0
          %1306 = vmatpush1.bf16.xpose.msra.mxu0 0
          %1307 = vmatprep.subr.bf16.mxu0 0
          %1308 = vmatpush1.bf16.xpose.msra.mxu0 0
          %1309 = vmatprep.subr.bf16.mxu0 0
          %1310 = vmatpush1.bf16.xpose.msra.mxu0 0
          %1311 = vmatprep.subr.bf16.mxu0 0
          %1312 = vmatpush1.bf16.xpose.msra.mxu0 0
          %1313 = vmatprep.subr.bf16.mxu0 0
          %1314 = vmatpush1.bf16.xpose.msra.mxu0 0
          %1315 = vmatprep.subr.bf16.mxu0 0
          %1316 = vmatpush1.bf16.xpose.msra.mxu0 0
          %1317 = vmatprep.subr.bf16.mxu0 0
          %1318 = vmatpush1.bf16.xpose.msra.mxu0 0
          %1319 = vmatprep.subr.bf16.mxu0 0
          %1320 = vmatpush1.bf16.xpose.msra.mxu0 0
          %1321 = vmatprep.subr.bf16.mxu0 0
          %1322 = vmatpush1.bf16.xpose.msra.mxu0 0
          %1323 = vmatprep.subr.bf16.mxu0 0
          %1324 = vmatpush1.bf16.xpose.msra.mxu0 0
          %1325 = vmatprep.subr.bf16.mxu0 0
          %1326 = vmatpush1.bf16.xpose.msra.mxu0 0
          %1327 = vmatprep.subr.bf16.mxu0 0
          %1328 = vmatpush1.bf16.xpose.msra.mxu0 0
          %1329 = vmatprep.subr.bf16.mxu0 0
          %1330 = vmatpush1.bf16.xpose.msra.mxu0 0
          %1331 = vmatprep.subr.bf16.mxu0 0
          %1332 = vmatpush1.bf16.xpose.msra.mxu0 0
          %1333 = vmatprep.mubr.bf16.mxu0 %v772
          %1334 = vmatmul.mubr.bf16.gmra.mrb[0].mxu0 %v771
          %v1335 = vpop.f32.mrb[0].mxu0
          %v1336 = vadd.f32 %v1239, %v1335
          %v1337 = vpop.f32.mrb[0].mxu0
          %v1338 = vpop.f32.mrb[0].mxu0
          %v1339 = vadd.f32 %v1242, %v1338
          %v1340 = vpop.f32.mrb[0].mxu0
          %1341 = vmatprep.mubr.bf16.mxu0 %v782
          %1342 = vmatmul.mubr.bf16.gmra.mrb[0].mxu0 %v781
          %v1343 = vpop.f32.mrb[0].mxu0
          %v1344 = vadd.f32 %v1247, %v1343
          %v1345 = vpop.f32.mrb[0].mxu0
          %v1346 = vpop.f32.mrb[0].mxu0
          %v1347 = vadd.f32 %v1250, %v1346
          %v1348 = vpop.f32.mrb[0].mxu0
          %1349 = vmatprep.mubr.bf16.mxu0 %v792
          %1350 = vmatmul.mubr.bf16.gmra.mrb[0].mxu0 %v791
          %v1351 = vpop.f32.mrb[0].mxu0
          %v1352 = vadd.f32 %v1255, %v1351
          %v1353 = vpop.f32.mrb[0].mxu0
          %v1354 = vpop.f32.mrb[0].mxu0
          %v1355 = vadd.f32 %v1258, %v1354
          %v1356 = vpop.f32.mrb[0].mxu0
          %1357 = vmatprep.mubr.bf16.mxu0 %v802
          %1358 = vmatmul.mubr.bf16.gmra.mrb[0].mxu0 %v801
          %v1359 = vpop.f32.mrb[0].mxu0
          %v1360 = vadd.f32 %v1263, %v1359
          %v1361 = vpop.f32.mrb[0].mxu0
          %v1362 = vpop.f32.mrb[0].mxu0
          %v1363 = vadd.f32 %v1266, %v1362
          %v1364 = vpop.f32.mrb[0].mxu0
          %1365 = vmatprep.mubr.bf16.mxu0 %v812
          %1366 = vmatmul.mubr.bf16.gmra.mrb[0].mxu0 %v811
          %v1367 = vpop.f32.mrb[0].mxu0
          %v1368 = vadd.f32 %v1271, %v1367
          %v1369 = vpop.f32.mrb[0].mxu0
          %v1370 = vpop.f32.mrb[0].mxu0
          %v1371 = vadd.f32 %v1274, %v1370
          %v1372 = vpop.f32.mrb[0].mxu0
          %1373 = vmatprep.mubr.bf16.mxu0 %v822
          %1374 = vmatmul.mubr.bf16.gmra.mrb[0].mxu0 %v821
          %v1375 = vpop.f32.mrb[0].mxu0
          %v1376 = vadd.f32 %v1279, %v1375
          %v1377 = vpop.f32.mrb[0].mxu0
          %v1378 = vpop.f32.mrb[0].mxu0
          %v1379 = vadd.f32 %v1282, %v1378
          %v1380 = vpop.f32.mrb[0].mxu0
          %1381 = vmatprep.mubr.bf16.mxu0 %v832
          %1382 = vmatmul.mubr.bf16.gmra.mrb[0].mxu0 %v831
          %v1383 = vpop.f32.mrb[0].mxu0
          %v1384 = vadd.f32 %v1287, %v1383
          %v1385 = vpop.f32.mrb[0].mxu0
          %v1386 = vpop.f32.mrb[0].mxu0
          %v1387 = vadd.f32 %v1290, %v1386
          %v1388 = vpop.f32.mrb[0].mxu0
          %1389 = vmatprep.mubr.bf16.mxu0 %v842
          %1390 = vmatmul.mubr.bf16.gmra.mrb[0].mxu0 %v841
          %v1391 = vpop.f32.mrb[0].mxu0
          %v1392 = vadd.f32 %v1295, %v1391
          %v1393 = vpop.f32.mrb[0].mxu0
          %v1394 = vpop.f32.mrb[0].mxu0
          %v1395 = vadd.f32 %v1298, %v1394
          %v1396 = vpop.f32.mrb[0].mxu0
          %1397 = vdwg.mxu0
          %1398 = vmatprep.subr.bf16.mxu0 %v979
          %1399 = vmatpush1.bf16.xpose.msra.mxu0 %v978
          %1400 = vmatprep.subr.bf16.mxu0 %v989
          %1401 = vmatpush1.bf16.xpose.msra.mxu0 %v988
          %1402 = vmatprep.subr.bf16.mxu0 0
          %1403 = vmatpush1.bf16.xpose.msra.mxu0 0
          %1404 = vmatprep.subr.bf16.mxu0 0
          %1405 = vmatpush1.bf16.xpose.msra.mxu0 0
          %1406 = vmatprep.subr.bf16.mxu0 0
          %1407 = vmatpush1.bf16.xpose.msra.mxu0 0
          %1408 = vmatprep.subr.bf16.mxu0 0
          %1409 = vmatpush1.bf16.xpose.msra.mxu0 0
          %1410 = vmatprep.subr.bf16.mxu0 0
          %1411 = vmatpush1.bf16.xpose.msra.mxu0 0
          %1412 = vmatprep.subr.bf16.mxu0 0
          %1413 = vmatpush1.bf16.xpose.msra.mxu0 0
          %1414 = vmatprep.subr.bf16.mxu0 0
          %1415 = vmatpush1.bf16.xpose.msra.mxu0 0
          %1416 = vmatprep.subr.bf16.mxu0 0
          %1417 = vmatpush1.bf16.xpose.msra.mxu0 0
          %1418 = vmatprep.subr.bf16.mxu0 0
          %1419 = vmatpush1.bf16.xpose.msra.mxu0 0
          %1420 = vmatprep.subr.bf16.mxu0 0
          %1421 = vmatpush1.bf16.xpose.msra.mxu0 0
          %1422 = vmatprep.subr.bf16.mxu0 0
          %1423 = vmatpush1.bf16.xpose.msra.mxu0 0
          %1424 = vmatprep.subr.bf16.mxu0 0
          %1425 = vmatpush1.bf16.xpose.msra.mxu0 0
          %1426 = vmatprep.subr.bf16.mxu0 0
          %1427 = vmatpush1.bf16.xpose.msra.mxu0 0
          %1428 = vmatprep.subr.bf16.mxu0 0
          %1429 = vmatpush1.bf16.xpose.msra.mxu0 0
          %1430 = vmatprep.mubr.bf16.mxu0 %v774
          %1431 = vmatmul.mubr.bf16.gmra.mrb[0].mxu0 %v773
          %v1432 = vpop.f32.mrb[0].mxu0
          %v1433 = vadd.f32 %v1336, %v1432
          %v1434 = vpop.f32.mrb[0].mxu0
          %v1435 = vpop.f32.mrb[0].mxu0
          %v1436 = vadd.f32 %v1339, %v1435
          %v1437 = vpop.f32.mrb[0].mxu0
          %1438 = vmatprep.mubr.bf16.mxu0 %v784
          %1439 = vmatmul.mubr.bf16.gmra.mrb[0].mxu0 %v783
          %v1440 = vpop.f32.mrb[0].mxu0
          %v1441 = vadd.f32 %v1344, %v1440
          %v1442 = vpop.f32.mrb[0].mxu0
          %v1443 = vpop.f32.mrb[0].mxu0
          %v1444 = vadd.f32 %v1347, %v1443
          %v1445 = vpop.f32.mrb[0].mxu0
          %1446 = vmatprep.mubr.bf16.mxu0 %v794
          %1447 = vmatmul.mubr.bf16.gmra.mrb[0].mxu0 %v793
          %v1448 = vpop.f32.mrb[0].mxu0
          %v1449 = vadd.f32 %v1352, %v1448
          %v1450 = vpop.f32.mrb[0].mxu0
          %v1451 = vpop.f32.mrb[0].mxu0
          %v1452 = vadd.f32 %v1355, %v1451
          %v1453 = vpop.f32.mrb[0].mxu0
          %1454 = vmatprep.mubr.bf16.mxu0 %v804
          %1455 = vmatmul.mubr.bf16.gmra.mrb[0].mxu0 %v803
          %v1456 = vpop.f32.mrb[0].mxu0
          %v1457 = vadd.f32 %v1360, %v1456
          %v1458 = vpop.f32.mrb[0].mxu0
          %v1459 = vpop.f32.mrb[0].mxu0
          %v1460 = vadd.f32 %v1363, %v1459
          %v1461 = vpop.f32.mrb[0].mxu0
          %1462 = vmatprep.mubr.bf16.mxu0 %v814
          %1463 = vmatmul.mubr.bf16.gmra.mrb[0].mxu0 %v813
          %v1464 = vpop.f32.mrb[0].mxu0
          %v1465 = vadd.f32 %v1368, %v1464
          %v1466 = vpop.f32.mrb[0].mxu0
          %v1467 = vpop.f32.mrb[0].mxu0
          %v1468 = vadd.f32 %v1371, %v1467
          %v1469 = vpop.f32.mrb[0].mxu0
          %1470 = vmatprep.mubr.bf16.mxu0 %v824
          %1471 = vmatmul.mubr.bf16.gmra.mrb[0].mxu0 %v823
          %v1472 = vpop.f32.mrb[0].mxu0
          %v1473 = vadd.f32 %v1376, %v1472
          %v1474 = vpop.f32.mrb[0].mxu0
          %v1475 = vpop.f32.mrb[0].mxu0
          %v1476 = vadd.f32 %v1379, %v1475
          %v1477 = vpop.f32.mrb[0].mxu0
          %1478 = vmatprep.mubr.bf16.mxu0 %v834
          %1479 = vmatmul.mubr.bf16.gmra.mrb[0].mxu0 %v833
          %v1480 = vpop.f32.mrb[0].mxu0
          %v1481 = vadd.f32 %v1384, %v1480
          %v1482 = vpop.f32.mrb[0].mxu0
          %v1483 = vpop.f32.mrb[0].mxu0
          %v1484 = vadd.f32 %v1387, %v1483
          %v1485 = vpop.f32.mrb[0].mxu0
          %1486 = vmatprep.mubr.bf16.mxu0 %v844
          %1487 = vmatmul.mubr.bf16.gmra.mrb[0].mxu0 %v843
          %v1488 = vpop.f32.mrb[0].mxu0
          %v1489 = vadd.f32 %v1392, %v1488
          %v1490 = vpop.f32.mrb[0].mxu0
          %v1491 = vpop.f32.mrb[0].mxu0
          %v1492 = vadd.f32 %v1395, %v1491
          %v1493 = vpop.f32.mrb[0].mxu0
          %1494 = vdwg.mxu0
          %v1495 = vxor.u32 %v1433, 2147483648
          %v1496 = vxor.u32 %v1436, 2147483648
          %v1497 = vxor.u32 %v1441, 2147483648
          %v1498 = vxor.u32 %v1444, 2147483648
          %v1499 = vxor.u32 %v1449, 2147483648
          %v1500 = vxor.u32 %v1452, 2147483648
          %v1501 = vxor.u32 %v1457, 2147483648
          %v1502 = vxor.u32 %v1460, 2147483648
          %v1503 = vxor.u32 %v1465, 2147483648
          %v1504 = vxor.u32 %v1468, 2147483648
          %v1505 = vxor.u32 %v1473, 2147483648
          %v1506 = vxor.u32 %v1476, 2147483648
          %v1507 = vxor.u32 %v1481, 2147483648
          %v1508 = vxor.u32 %v1484, 2147483648
          %v1509 = vxor.u32 %v1489, 2147483648
          %v1510 = vxor.u32 %v1492, 2147483648
          %v1511 = vmul.f32 %v1495, 1.442695
          %v1512 = vpow.pop %v1511
          %v1513 = vmul.f32 %v1496, 1.442695
          %v1514 = vpow.pop %v1513
          %v1515 = vmul.f32 %v1497, 1.442695
          %v1516 = vpow.pop %v1515
          %v1517 = vmul.f32 %v1498, 1.442695
          %v1518 = vpow.pop %v1517
          %v1519 = vmul.f32 %v1499, 1.442695
          %v1520 = vpow.pop %v1519
          %v1521 = vmul.f32 %v1500, 1.442695
          %v1522 = vpow.pop %v1521
          %v1523 = vmul.f32 %v1501, 1.442695
          %v1524 = vpow.pop %v1523
          %v1525 = vmul.f32 %v1502, 1.442695
          %v1526 = vpow.pop %v1525
          %v1527 = vmul.f32 %v1503, 1.442695
          %v1528 = vpow.pop %v1527
          %v1529 = vmul.f32 %v1504, 1.442695
          %v1530 = vpow.pop %v1529
          %v1531 = vmul.f32 %v1505, 1.442695
          %v1532 = vpow.pop %v1531
          %v1533 = vmul.f32 %v1506, 1.442695
          %v1534 = vpow.pop %v1533
          %v1535 = vmul.f32 %v1507, 1.442695
          %v1536 = vpow.pop %v1535
          %v1537 = vmul.f32 %v1508, 1.442695
          %v1538 = vpow.pop %v1537
          %v1539 = vmul.f32 %v1509, 1.442695
          %v1540 = vpow.pop %v1539
          %v1541 = vmul.f32 %v1510, 1.442695
          %v1542 = vpow.pop %v1541
          %v1543 = vadd.f32 %v1512, 1.0
          %v1544 = vadd.f32 %v1514, 1.0
          %v1545 = vadd.f32 %v1516, 1.0
          %v1546 = vadd.f32 %v1518, 1.0
          %v1547 = vadd.f32 %v1520, 1.0
          %v1548 = vadd.f32 %v1522, 1.0
          %v1549 = vadd.f32 %v1524, 1.0
          %v1550 = vadd.f32 %v1526, 1.0
          %v1551 = vadd.f32 %v1528, 1.0
          %v1552 = vadd.f32 %v1530, 1.0
          %v1553 = vadd.f32 %v1532, 1.0
          %v1554 = vadd.f32 %v1534, 1.0
          %v1555 = vadd.f32 %v1536, 1.0
          %v1556 = vadd.f32 %v1538, 1.0
          %v1557 = vadd.f32 %v1540, 1.0
          %v1558 = vadd.f32 %v1542, 1.0
          %v1559 = vrcp.pop %v1543
          %v1560 = vmul.f32 1.0, %v1559
          %v1561 = vrcp.pop %v1544
          %v1562 = vmul.f32 1.0, %v1561
          %v1563 = vrcp.pop %v1545
          %v1564 = vmul.f32 1.0, %v1563
          %v1565 = vrcp.pop %v1546
          %v1566 = vmul.f32 1.0, %v1565
          %v1567 = vrcp.pop %v1547
          %v1568 = vmul.f32 1.0, %v1567
          %v1569 = vrcp.pop %v1548
          %v1570 = vmul.f32 1.0, %v1569
          %v1571 = vrcp.pop %v1549
          %v1572 = vmul.f32 1.0, %v1571
          %v1573 = vrcp.pop %v1550
          %v1574 = vmul.f32 1.0, %v1573
          %v1575 = vrcp.pop %v1551
          %v1576 = vmul.f32 1.0, %v1575
          %v1577 = vrcp.pop %v1552
          %v1578 = vmul.f32 1.0, %v1577
          %v1579 = vrcp.pop %v1553
          %v1580 = vmul.f32 1.0, %v1579
          %v1581 = vrcp.pop %v1554
          %v1582 = vmul.f32 1.0, %v1581
          %v1583 = vrcp.pop %v1555
          %v1584 = vmul.f32 1.0, %v1583
          %v1585 = vrcp.pop %v1556
          %v1586 = vmul.f32 1.0, %v1585
          %v1587 = vrcp.pop %v1557
          %v1588 = vmul.f32 1.0, %v1587
          %v1589 = vrcp.pop %v1558
          %v1590 = vmul.f32 1.0, %v1589
          %v1591 = vpack.c.bf16 %v1562, %v1560
          %v1592 = vpack.c.bf16 %v1566, %v1564
          %v1593 = vpack.c.bf16 %v1570, %v1568
          %v1594 = vpack.c.bf16 %v1574, %v1572
          %v1595 = vpack.c.bf16 %v1578, %v1576
          %v1596 = vpack.c.bf16 %v1582, %v1580
          %v1597 = vpack.c.bf16 %v1586, %v1584
          %v1598 = vpack.c.bf16 %v1590, %v1588
          %v1599 = vld [vmem:[%s3] sm:$0xf]
          %v1600 = vld [vmem:[%s3 + $0x4] sm:$0xf]
          %v1601 = vld [vmem:[%s3 + $0x8] sm:$0x3]
          %v1602 = vld [vmem:[%s4] sm:$0x1]
          %v1604 = vlaneseq
          %v1605 = vshrl.u32 %v1604, 7
          %v1606 = vsub.s32 0, %v1605
          %v1607 = vrot.slane %v1602, %v1606
          %v1612 = vunpack.c.l.b16 %v1599
          %v1613 = vunpack.c.l.b16 %v1600
          %v1614 = vunpack.c.l.b16 %v1601
          %v1615 = vpack.c.b16 %v1613, %v1612
          %v1616 = vpack.c.b16 %v1614, %v1614
          %vm1618 = vcmask 162816
          %v1620 = vsel %vm1618, %v1591, 0
          %v1623 = vsel %vm1618, %v1592, 0
          %v1626 = vsel %vm1618, %v1593, 0
          %v1629 = vsel %vm1618, %v1594, 0
          %v1632 = vsel %vm1618, %v1595, 0
          %v1635 = vsel %vm1618, %v1596, 0
          %v1638 = vsel %vm1618, %v1597, 0
          %v1641 = vsel %vm1618, %v1598, 0
          %vm1643 = vcmask 1041408
          %v1645 = vsel %vm1643, %v1616, 0
          %1647 = vmatprep.subr.bf16.mxu0 0
          %1648 = vmatpush1.bf16.msra.mxu0 %v1615
          %1649 = vmatprep.subr.bf16.mxu0 0
          %1650 = vmatpush1.bf16.msra.mxu0 %v1645
          %1651 = vmatprep.subr.bf16.mxu0 0
          %1652 = vmatpush1.bf16.msra.mxu0 0
          %1653 = vmatprep.subr.bf16.mxu0 0
          %1654 = vmatpush1.bf16.msra.mxu0 0
          %1655 = vmatprep.subr.bf16.mxu0 0
          %1656 = vmatpush1.bf16.msra.mxu0 0
          %1657 = vmatprep.subr.bf16.mxu0 0
          %1658 = vmatpush1.bf16.msra.mxu0 0
          %1659 = vmatprep.subr.bf16.mxu0 0
          %1660 = vmatpush1.bf16.msra.mxu0 0
          %1661 = vmatprep.subr.bf16.mxu0 0
          %1662 = vmatpush1.bf16.msra.mxu0 0
          %1663 = vmatprep.subr.bf16.mxu0 0
          %1664 = vmatpush1.bf16.msra.mxu0 0
          %1665 = vmatprep.subr.bf16.mxu0 0
          %1666 = vmatpush1.bf16.msra.mxu0 0
          %1667 = vmatprep.subr.bf16.mxu0 0
          %1668 = vmatpush1.bf16.msra.mxu0 0
          %1669 = vmatprep.subr.bf16.mxu0 0
          %1670 = vmatpush1.bf16.msra.mxu0 0
          %1671 = vmatprep.subr.bf16.mxu0 0
          %1672 = vmatpush1.bf16.msra.mxu0 0
          %1673 = vmatprep.subr.bf16.mxu0 0
          %1674 = vmatpush1.bf16.msra.mxu0 0
          %1675 = vmatprep.subr.bf16.mxu0 0
          %1676 = vmatpush1.bf16.msra.mxu0 0
          %1677 = vmatprep.subr.bf16.mxu0 0
          %1678 = vmatpush1.bf16.msra.mxu0 0
          %1679 = vmatprep.mubr.bf16.mxu0 0
          %1680 = vmatmul.mubr.bf16.gmra.mrb[0].mxu0 %v1620
          %v1681 = vpop.f32.mrb[0].mxu0
          %v1682 = vadd.f32 %v1607, %v1681
          %v1683 = vpop.f32.mrb[0].mxu0
          %v1684 = vpop.f32.mrb[0].mxu0
          %v1685 = vadd.f32 %v1607, %v1684
          %v1686 = vpop.f32.mrb[0].mxu0
          %1687 = vmatprep.mubr.bf16.mxu0 0
          %1688 = vmatmul.mubr.bf16.gmra.mrb[0].mxu0 %v1623
          %v1689 = vpop.f32.mrb[0].mxu0
          %v1690 = vadd.f32 %v1607, %v1689
          %v1691 = vpop.f32.mrb[0].mxu0
          %v1692 = vpop.f32.mrb[0].mxu0
          %v1693 = vadd.f32 %v1607, %v1692
          %v1694 = vpop.f32.mrb[0].mxu0
          %1695 = vmatprep.mubr.bf16.mxu0 0
          %1696 = vmatmul.mubr.bf16.gmra.mrb[0].mxu0 %v1626
          %v1697 = vpop.f32.mrb[0].mxu0
          %v1698 = vadd.f32 %v1607, %v1697
          %v1699 = vpop.f32.mrb[0].mxu0
          %v1700 = vpop.f32.mrb[0].mxu0
          %v1701 = vadd.f32 %v1607, %v1700
          %v1702 = vpop.f32.mrb[0].mxu0
          %1703 = vmatprep.mubr.bf16.mxu0 0
          %1704 = vmatmul.mubr.bf16.gmra.mrb[0].mxu0 %v1629
          %v1705 = vpop.f32.mrb[0].mxu0
          %v1706 = vadd.f32 %v1607, %v1705
          %v1707 = vpop.f32.mrb[0].mxu0
          %v1708 = vpop.f32.mrb[0].mxu0
          %v1709 = vadd.f32 %v1607, %v1708
          %v1710 = vpop.f32.mrb[0].mxu0
          %1711 = vmatprep.mubr.bf16.mxu0 0
          %1712 = vmatmul.mubr.bf16.gmra.mrb[0].mxu0 %v1632
          %v1713 = vpop.f32.mrb[0].mxu0
          %v1714 = vadd.f32 %v1607, %v1713
          %v1715 = vpop.f32.mrb[0].mxu0
          %v1716 = vpop.f32.mrb[0].mxu0
          %v1717 = vadd.f32 %v1607, %v1716
          %v1718 = vpop.f32.mrb[0].mxu0
          %1719 = vmatprep.mubr.bf16.mxu0 0
          %1720 = vmatmul.mubr.bf16.gmra.mrb[0].mxu0 %v1635
          %v1721 = vpop.f32.mrb[0].mxu0
          %v1722 = vadd.f32 %v1607, %v1721
          %v1723 = vpop.f32.mrb[0].mxu0
          %v1724 = vpop.f32.mrb[0].mxu0
          %v1725 = vadd.f32 %v1607, %v1724
          %v1726 = vpop.f32.mrb[0].mxu0
          %1727 = vmatprep.mubr.bf16.mxu0 0
          %1728 = vmatmul.mubr.bf16.gmra.mrb[0].mxu0 %v1638
          %v1729 = vpop.f32.mrb[0].mxu0
          %v1730 = vadd.f32 %v1607, %v1729
          %v1731 = vpop.f32.mrb[0].mxu0
          %v1732 = vpop.f32.mrb[0].mxu0
          %v1733 = vadd.f32 %v1607, %v1732
          %v1734 = vpop.f32.mrb[0].mxu0
          %1735 = vmatprep.mubr.bf16.mxu0 0
          %1736 = vmatmul.mubr.bf16.gmra.mrb[0].mxu0 %v1641
          %v1737 = vpop.f32.mrb[0].mxu0
          %v1738 = vadd.f32 %v1607, %v1737
          %v1739 = vpop.f32.mrb[0].mxu0
          %v1740 = vpop.f32.mrb[0].mxu0
          %v1741 = vadd.f32 %v1607, %v1740
          %v1742 = vpop.f32.mrb[0].mxu0
          %1743 = vdwg.mxu0
          %v1744 = vxor.u32 %v1682, 2147483648
          %v1745 = vxor.u32 %v1685, 2147483648
          %v1746 = vxor.u32 %v1690, 2147483648
          %v1747 = vxor.u32 %v1693, 2147483648
          %v1748 = vxor.u32 %v1698, 2147483648
          %v1749 = vxor.u32 %v1701, 2147483648
          %v1750 = vxor.u32 %v1706, 2147483648
          %v1751 = vxor.u32 %v1709, 2147483648
          %v1752 = vxor.u32 %v1714, 2147483648
          %v1753 = vxor.u32 %v1717, 2147483648
          %v1754 = vxor.u32 %v1722, 2147483648
          %v1755 = vxor.u32 %v1725, 2147483648
          %v1756 = vxor.u32 %v1730, 2147483648
          %v1757 = vxor.u32 %v1733, 2147483648
          %v1758 = vxor.u32 %v1738, 2147483648
          %v1759 = vxor.u32 %v1741, 2147483648
          %v1760 = vmul.f32 %v1744, 1.442695
          %v1761 = vpow.pop %v1760
          %v1762 = vmul.f32 %v1745, 1.442695
          %v1763 = vpow.pop %v1762
          %v1764 = vmul.f32 %v1746, 1.442695
          %v1765 = vpow.pop %v1764
          %v1766 = vmul.f32 %v1747, 1.442695
          %v1767 = vpow.pop %v1766
          %v1768 = vmul.f32 %v1748, 1.442695
          %v1769 = vpow.pop %v1768
          %v1770 = vmul.f32 %v1749, 1.442695
          %v1771 = vpow.pop %v1770
          %v1772 = vmul.f32 %v1750, 1.442695
          %v1773 = vpow.pop %v1772
          %v1774 = vmul.f32 %v1751, 1.442695
          %v1775 = vpow.pop %v1774
          %v1776 = vmul.f32 %v1752, 1.442695
          %v1777 = vpow.pop %v1776
          %v1778 = vmul.f32 %v1753, 1.442695
          %v1779 = vpow.pop %v1778
          %v1780 = vmul.f32 %v1754, 1.442695
          %v1781 = vpow.pop %v1780
          %v1782 = vmul.f32 %v1755, 1.442695
          %v1783 = vpow.pop %v1782
          %v1784 = vmul.f32 %v1756, 1.442695
          %v1785 = vpow.pop %v1784
          %v1786 = vmul.f32 %v1757, 1.442695
          %v1787 = vpow.pop %v1786
          %v1788 = vmul.f32 %v1758, 1.442695
          %v1789 = vpow.pop %v1788
          %v1790 = vmul.f32 %v1759, 1.442695
          %v1791 = vpow.pop %v1790
          %v1792 = vadd.f32 %v1761, 1.0
          %v1793 = vadd.f32 %v1763, 1.0
          %v1794 = vadd.f32 %v1765, 1.0
          %v1795 = vadd.f32 %v1767, 1.0
          %v1796 = vadd.f32 %v1769, 1.0
          %v1797 = vadd.f32 %v1771, 1.0
          %v1798 = vadd.f32 %v1773, 1.0
          %v1799 = vadd.f32 %v1775, 1.0
          %v1800 = vadd.f32 %v1777, 1.0
          %v1801 = vadd.f32 %v1779, 1.0
          %v1802 = vadd.f32 %v1781, 1.0
          %v1803 = vadd.f32 %v1783, 1.0
          %v1804 = vadd.f32 %v1785, 1.0
          %v1805 = vadd.f32 %v1787, 1.0
          %v1806 = vadd.f32 %v1789, 1.0
          %v1807 = vadd.f32 %v1791, 1.0
          %v1808 = vrcp.pop %v1792
          %v1809 = vmul.f32 1.0, %v1808
          %v1810 = vrcp.pop %v1793
          %v1811 = vmul.f32 1.0, %v1810
          %v1812 = vrcp.pop %v1794
          %v1813 = vmul.f32 1.0, %v1812
          %v1814 = vrcp.pop %v1795
          %v1815 = vmul.f32 1.0, %v1814
          %v1816 = vrcp.pop %v1796
          %v1817 = vmul.f32 1.0, %v1816
          %v1818 = vrcp.pop %v1797
          %v1819 = vmul.f32 1.0, %v1818
          %v1820 = vrcp.pop %v1798
          %v1821 = vmul.f32 1.0, %v1820
          %v1822 = vrcp.pop %v1799
          %v1823 = vmul.f32 1.0, %v1822
          %v1824 = vrcp.pop %v1800
          %v1825 = vmul.f32 1.0, %v1824
          %v1826 = vrcp.pop %v1801
          %v1827 = vmul.f32 1.0, %v1826
          %v1828 = vrcp.pop %v1802
          %v1829 = vmul.f32 1.0, %v1828
          %v1830 = vrcp.pop %v1803
          %v1831 = vmul.f32 1.0, %v1830
          %v1832 = vrcp.pop %v1804
          %v1833 = vmul.f32 1.0, %v1832
          %v1834 = vrcp.pop %v1805
          %v1835 = vmul.f32 1.0, %v1834
          %v1836 = vrcp.pop %v1806
          %v1837 = vmul.f32 1.0, %v1836
          %v1838 = vrcp.pop %v1807
          %v1839 = vmul.f32 1.0, %v1838
          %v1840 = vpack.c.bf16 %v1811, %v1809
          %v1841 = vpack.c.bf16 %v1815, %v1813
          %v1842 = vpack.c.bf16 %v1819, %v1817
          %v1843 = vpack.c.bf16 %v1823, %v1821
          %v1844 = vpack.c.bf16 %v1827, %v1825
          %v1845 = vpack.c.bf16 %v1831, %v1829
          %v1846 = vpack.c.bf16 %v1835, %v1833
          %v1847 = vpack.c.bf16 %v1839, %v1837
          %v1848 = vld [vmem:[%s5] sm:$0xf]
          %v1849 = vld [vmem:[%s5 + $0x4] sm:$0x1]
          %v1850 = vld [vmem:[%s6] sm:$0x1]
          %v1852 = vlaneseq
          %v1853 = vshrl.u32 %v1852, 7
          %v1854 = vsub.s32 0, %v1853
          %v1855 = vrot.slane %v1850, %v1854
          %v1859 = vunpack.c.l.b16 %v1848
          %v1860 = vunpack.c.l.b16 %v1849
          %v1861 = vpack.c.b16 %v1860, %v1859
          %vm1862 = vcmask 80896
          %v1864 = vsel %vm1862, %v1840, 0
          %v1867 = vsel %vm1862, %v1841, 0
          %v1870 = vsel %vm1862, %v1842, 0
          %v1873 = vsel %vm1862, %v1843, 0
          %v1876 = vsel %vm1862, %v1844, 0
          %v1879 = vsel %vm1862, %v1845, 0
          %v1882 = vsel %vm1862, %v1846, 0
          %v1885 = vsel %vm1862, %v1847, 0
          %vm1887 = vcmask 1044480
          %v1889 = vsel %vm1887, %v1861, 0
          %1891 = vmatprep.subr.bf16.mxu0 0
          %1892 = vmatpush1.bf16.msra.mxu0 %v1889
          %1893 = vmatprep.subr.bf16.mxu0 0
          %1894 = vmatpush1.bf16.msra.mxu0 0
          %1895 = vmatprep.subr.bf16.mxu0 0
          %1896 = vmatpush1.bf16.msra.mxu0 0
          %1897 = vmatprep.subr.bf16.mxu0 0
          %1898 = vmatpush1.bf16.msra.mxu0 0
          %1899 = vmatprep.subr.bf16.mxu0 0
          %1900 = vmatpush1.bf16.msra.mxu0 0
          %1901 = vmatprep.subr.bf16.mxu0 0
          %1902 = vmatpush1.bf16.msra.mxu0 0
          %1903 = vmatprep.subr.bf16.mxu0 0
          %1904 = vmatpush1.bf16.msra.mxu0 0
          %1905 = vmatprep.subr.bf16.mxu0 0
          %1906 = vmatpush1.bf16.msra.mxu0 0
          %1907 = vmatprep.subr.bf16.mxu0 0
          %1908 = vmatpush1.bf16.msra.mxu0 0
          %1909 = vmatprep.subr.bf16.mxu0 0
          %1910 = vmatpush1.bf16.msra.mxu0 0
          %1911 = vmatprep.subr.bf16.mxu0 0
          %1912 = vmatpush1.bf16.msra.mxu0 0
          %1913 = vmatprep.subr.bf16.mxu0 0
          %1914 = vmatpush1.bf16.msra.mxu0 0
          %1915 = vmatprep.subr.bf16.mxu0 0
          %1916 = vmatpush1.bf16.msra.mxu0 0
          %1917 = vmatprep.subr.bf16.mxu0 0
          %1918 = vmatpush1.bf16.msra.mxu0 0
          %1919 = vmatprep.subr.bf16.mxu0 0
          %1920 = vmatpush1.bf16.msra.mxu0 0
          %1921 = vmatprep.subr.bf16.mxu0 0
          %1922 = vmatpush1.bf16.msra.mxu0 0
          %1923 = vmatprep.mubr.bf16.mxu0 0
          %1924 = vmatmul.mubr.bf16.gmra.mrb[0].mxu0 %v1864
          %v1925 = vpop.f32.mrb[0].mxu0
          %v1926 = vadd.f32 %v1855, %v1925
          %v1927 = vpop.f32.mrb[0].mxu0
          %v1928 = vpop.f32.mrb[0].mxu0
          %v1929 = vadd.f32 %v1855, %v1928
          %v1930 = vpop.f32.mrb[0].mxu0
          %1931 = vmatprep.mubr.bf16.mxu0 0
          %1932 = vmatmul.mubr.bf16.gmra.mrb[0].mxu0 %v1867
          %v1933 = vpop.f32.mrb[0].mxu0
          %v1934 = vadd.f32 %v1855, %v1933
          %v1935 = vpop.f32.mrb[0].mxu0
          %v1936 = vpop.f32.mrb[0].mxu0
          %v1937 = vadd.f32 %v1855, %v1936
          %v1938 = vpop.f32.mrb[0].mxu0
          %1939 = vmatprep.mubr.bf16.mxu0 0
          %1940 = vmatmul.mubr.bf16.gmra.mrb[0].mxu0 %v1870
          %v1941 = vpop.f32.mrb[0].mxu0
          %v1942 = vadd.f32 %v1855, %v1941
          %v1943 = vpop.f32.mrb[0].mxu0
          %v1944 = vpop.f32.mrb[0].mxu0
          %v1945 = vadd.f32 %v1855, %v1944
          %v1946 = vpop.f32.mrb[0].mxu0
          %1947 = vmatprep.mubr.bf16.mxu0 0
          %1948 = vmatmul.mubr.bf16.gmra.mrb[0].mxu0 %v1873
          %v1949 = vpop.f32.mrb[0].mxu0
          %v1950 = vadd.f32 %v1855, %v1949
          %v1951 = vpop.f32.mrb[0].mxu0
          %v1952 = vpop.f32.mrb[0].mxu0
          %v1953 = vadd.f32 %v1855, %v1952
          %v1954 = vpop.f32.mrb[0].mxu0
          %1955 = vmatprep.mubr.bf16.mxu0 0
          %1956 = vmatmul.mubr.bf16.gmra.mrb[0].mxu0 %v1876
          %v1957 = vpop.f32.mrb[0].mxu0
          %v1958 = vadd.f32 %v1855, %v1957
          %v1959 = vpop.f32.mrb[0].mxu0
          %v1960 = vpop.f32.mrb[0].mxu0
          %v1961 = vadd.f32 %v1855, %v1960
          %v1962 = vpop.f32.mrb[0].mxu0
          %1963 = vmatprep.mubr.bf16.mxu0 0
          %1964 = vmatmul.mubr.bf16.gmra.mrb[0].mxu0 %v1879
          %v1965 = vpop.f32.mrb[0].mxu0
          %v1966 = vadd.f32 %v1855, %v1965
          %v1967 = vpop.f32.mrb[0].mxu0
          %v1968 = vpop.f32.mrb[0].mxu0
          %v1969 = vadd.f32 %v1855, %v1968
          %v1970 = vpop.f32.mrb[0].mxu0
          %1971 = vmatprep.mubr.bf16.mxu0 0
          %1972 = vmatmul.mubr.bf16.gmra.mrb[0].mxu0 %v1882
          %v1973 = vpop.f32.mrb[0].mxu0
          %v1974 = vadd.f32 %v1855, %v1973
          %v1975 = vpop.f32.mrb[0].mxu0
          %v1976 = vpop.f32.mrb[0].mxu0
          %v1977 = vadd.f32 %v1855, %v1976
          %v1978 = vpop.f32.mrb[0].mxu0
          %1979 = vmatprep.mubr.bf16.mxu0 0
          %1980 = vmatmul.mubr.bf16.gmra.mrb[0].mxu0 %v1885
          %v1981 = vpop.f32.mrb[0].mxu0
          %v1982 = vadd.f32 %v1855, %v1981
          %v1983 = vpop.f32.mrb[0].mxu0
          %v1984 = vpop.f32.mrb[0].mxu0
          %v1985 = vadd.f32 %v1855, %v1984
          %v1986 = vpop.f32.mrb[0].mxu0
          %1987 = vdwg.mxu0
          %v1988 = vxor.u32 %v1926, 2147483648
          %v1989 = vxor.u32 %v1929, 2147483648
          %v1990 = vxor.u32 %v1934, 2147483648
          %v1991 = vxor.u32 %v1937, 2147483648
          %v1992 = vxor.u32 %v1942, 2147483648
          %v1993 = vxor.u32 %v1945, 2147483648
          %v1994 = vxor.u32 %v1950, 2147483648
          %v1995 = vxor.u32 %v1953, 2147483648
          %v1996 = vxor.u32 %v1958, 2147483648
          %v1997 = vxor.u32 %v1961, 2147483648
          %v1998 = vxor.u32 %v1966, 2147483648
          %v1999 = vxor.u32 %v1969, 2147483648
          %v2000 = vxor.u32 %v1974, 2147483648
          %v2001 = vxor.u32 %v1977, 2147483648
          %v2002 = vxor.u32 %v1982, 2147483648
          %v2003 = vxor.u32 %v1985, 2147483648
          %v2004 = vmul.f32 %v1988, 1.442695
          %v2005 = vpow.pop %v2004
          %v2006 = vmul.f32 %v1989, 1.442695
          %v2007 = vpow.pop %v2006
          %v2008 = vmul.f32 %v1990, 1.442695
          %v2009 = vpow.pop %v2008
          %v2010 = vmul.f32 %v1991, 1.442695
          %v2011 = vpow.pop %v2010
          %v2012 = vmul.f32 %v1992, 1.442695
          %v2013 = vpow.pop %v2012
          %v2014 = vmul.f32 %v1993, 1.442695
          %v2015 = vpow.pop %v2014
          %v2016 = vmul.f32 %v1994, 1.442695
          %v2017 = vpow.pop %v2016
          %v2018 = vmul.f32 %v1995, 1.442695
          %v2019 = vpow.pop %v2018
          %v2020 = vmul.f32 %v1996, 1.442695
          %v2021 = vpow.pop %v2020
          %v2022 = vmul.f32 %v1997, 1.442695
          %v2023 = vpow.pop %v2022
          %v2024 = vmul.f32 %v1998, 1.442695
          %v2025 = vpow.pop %v2024
          %v2026 = vmul.f32 %v1999, 1.442695
          %v2027 = vpow.pop %v2026
          %v2028 = vmul.f32 %v2000, 1.442695
          %v2029 = vpow.pop %v2028
          %v2030 = vmul.f32 %v2001, 1.442695
          %v2031 = vpow.pop %v2030
          %v2032 = vmul.f32 %v2002, 1.442695
          %v2033 = vpow.pop %v2032
          %v2034 = vmul.f32 %v2003, 1.442695
          %v2035 = vpow.pop %v2034
          %v2036 = vadd.f32 %v2005, 1.0
          %v2037 = vadd.f32 %v2007, 1.0
          %v2038 = vadd.f32 %v2009, 1.0
          %v2039 = vadd.f32 %v2011, 1.0
          %v2040 = vadd.f32 %v2013, 1.0
          %v2041 = vadd.f32 %v2015, 1.0
          %v2042 = vadd.f32 %v2017, 1.0
          %v2043 = vadd.f32 %v2019, 1.0
          %v2044 = vadd.f32 %v2021, 1.0
          %v2045 = vadd.f32 %v2023, 1.0
          %v2046 = vadd.f32 %v2025, 1.0
          %v2047 = vadd.f32 %v2027, 1.0
          %v2048 = vadd.f32 %v2029, 1.0
          %v2049 = vadd.f32 %v2031, 1.0
          %v2050 = vadd.f32 %v2033, 1.0
          %v2051 = vadd.f32 %v2035, 1.0
          %v2052 = vrcp.pop %v2036
          %v2053 = vmul.f32 1.0, %v2052
          %v2054 = vrcp.pop %v2037
          %v2055 = vmul.f32 1.0, %v2054
          %v2056 = vrcp.pop %v2038
          %v2057 = vmul.f32 1.0, %v2056
          %v2058 = vrcp.pop %v2039
          %v2059 = vmul.f32 1.0, %v2058
          %v2060 = vrcp.pop %v2040
          %v2061 = vmul.f32 1.0, %v2060
          %v2062 = vrcp.pop %v2041
          %v2063 = vmul.f32 1.0, %v2062
          %v2064 = vrcp.pop %v2042
          %v2065 = vmul.f32 1.0, %v2064
          %v2066 = vrcp.pop %v2043
          %v2067 = vmul.f32 1.0, %v2066
          %v2068 = vrcp.pop %v2044
          %v2069 = vmul.f32 1.0, %v2068
          %v2070 = vrcp.pop %v2045
          %v2071 = vmul.f32 1.0, %v2070
          %v2072 = vrcp.pop %v2046
          %v2073 = vmul.f32 1.0, %v2072
          %v2074 = vrcp.pop %v2047
          %v2075 = vmul.f32 1.0, %v2074
          %v2076 = vrcp.pop %v2048
          %v2077 = vmul.f32 1.0, %v2076
          %v2078 = vrcp.pop %v2049
          %v2079 = vmul.f32 1.0, %v2078
          %v2080 = vrcp.pop %v2050
          %v2081 = vmul.f32 1.0, %v2080
          %v2082 = vrcp.pop %v2051
          %v2083 = vmul.f32 1.0, %v2082
          %v2084 = vpack.c.bf16 %v2055, %v2053
          %v2085 = vpack.c.bf16 %v2059, %v2057
          %v2086 = vpack.c.bf16 %v2063, %v2061
          %v2087 = vpack.c.bf16 %v2067, %v2065
          %v2088 = vpack.c.bf16 %v2071, %v2069
          %v2089 = vpack.c.bf16 %v2075, %v2073
          %v2090 = vpack.c.bf16 %v2079, %v2077
          %v2091 = vpack.c.bf16 %v2083, %v2081
          %2092 = vst.msk [vmem:[#allocation2] sm:$0xff] %vm1618, %v2084
          %2093 = vst.msk [vmem:[#allocation2 + $0x8] sm:$0xff] %vm1618, %v2085
          %2094 = vst.msk [vmem:[#allocation2 + $0x10] sm:$0xff] %vm1618, %v2086
          %2095 = vst.msk [vmem:[#allocation2 + $0x18] sm:$0xff] %vm1618, %v2087
          %2096 = vst.msk [vmem:[#allocation2 + $0x20] sm:$0xff] %vm1618, %v2088
          %2097 = vst.msk [vmem:[#allocation2 + $0x28] sm:$0xff] %vm1618, %v2089
          %2098 = vst.msk [vmem:[#allocation2 + $0x30] sm:$0xff] %vm1618, %v2090
          %2099 = vst.msk [vmem:[#allocation2 + $0x38] sm:$0xff] %vm1618, %v2091
        $region83: #{sae_forward.1} parent=74 // pred_fallthru
          _
        %v2100 = vld [vmem:[#allocation2] sm:$0xff]
        %v2101 = vld [vmem:[#allocation2 + $0x8] sm:$0xff]
        %v2102 = vld [vmem:[#allocation2 + $0x10] sm:$0xff]
        %v2103 = vld [vmem:[#allocation2 + $0x18] sm:$0xff]
        %v2104 = vld [vmem:[#allocation2 + $0x20] sm:$0xff]
        %v2105 = vld [vmem:[#allocation2 + $0x28] sm:$0xff]
        %v2106 = vld [vmem:[#allocation2 + $0x30] sm:$0xff]
        %v2107 = vld [vmem:[#allocation2 + $0x38] sm:$0xff]
        %v2108 = vld [vmem:[%s361] sm:$0xff]
        %v2109 = vld [vmem:[%s361 + $0x8] sm:$0xff]
        %v2110 = vld [vmem:[%s361 + $0x10] sm:$0xff]
        %v2111 = vld [vmem:[%s361 + $0x18] sm:$0xff]
        %v2112 = vld [vmem:[%s361 + $0x20] sm:$0x33]
        %v2113 = vld [vmem:[%s361 + $0x28] sm:$0x33]
        %v2114 = vld [vmem:[%s414] sm:$0xf]
        %v2116 = vlaneseq
        %v2117 = vshrl.u32 %v2116, 7
        %v2118 = vsub.s32 0, %v2117
        %v2119 = vrot.slane %v2114, %v2118
        %v2120 = vlaneseq
        %v2121 = vshrl.u32 %v2120, 7
        %v2122 = vsub.s32 1, %v2121
        %v2123 = vrot.slane %v2114, %v2122
        %v2124 = vlaneseq
        %v2125 = vshrl.u32 %v2124, 7
        %v2126 = vsub.s32 2, %v2125
        %v2127 = vrot.slane %v2114, %v2126
        %v2128 = vlaneseq
        %v2129 = vshrl.u32 %v2128, 7
        %v2130 = vsub.s32 3, %v2129
        %v2131 = vrot.slane %v2114, %v2130
        %v2142 = vunpack.c.l.b16 %v2108
        %v2143 = vunpack.c.h.b16 %v2108
        %v2144 = vunpack.c.l.b16 %v2109
        %v2145 = vunpack.c.h.b16 %v2109
        %v2146 = vunpack.c.l.b16 %v2110
        %v2147 = vunpack.c.h.b16 %v2110
        %v2148 = vunpack.c.l.b16 %v2111
        %v2149 = vunpack.c.h.b16 %v2111
        %v2150 = vunpack.c.l.b16 %v2112
        %v2151 = vunpack.c.h.b16 %v2112
        %v2152 = vunpack.c.l.b16 %v2113
        %v2153 = vunpack.c.h.b16 %v2113
        %v2154 = vpack.c.b16 %v2146, %v2142
        %v2155 = vpack.c.b16 %v2147, %v2143
        %v2156 = vpack.c.b16 %v2148, %v2144
        %v2157 = vpack.c.b16 %v2149, %v2145
        %v2158 = vpack.c.b16 %v2150, %v2150
        %v2159 = vpack.c.b16 %v2151, %v2151
        %v2160 = vpack.c.b16 %v2152, %v2152
        %v2161 = vpack.c.b16 %v2153, %v2153
        %vm2166 = vcmask 162816
        %v2168 = vsel %vm2166, %v2100, 0
        %v2171 = vsel %vm2166, %v2101, 0
        %v2174 = vsel %vm2166, %v2102, 0
        %v2177 = vsel %vm2166, %v2103, 0
        %v2180 = vsel %vm2166, %v2104, 0
        %v2183 = vsel %vm2166, %v2105, 0
        %v2186 = vsel %vm2166, %v2106, 0
        %v2189 = vsel %vm2166, %v2107, 0
        %vm2191 = vcmask 1041408
        %v2193 = vsel %vm2191, %v2158, 0
        %v2196 = vsel %vm2191, %v2159, 0
        %v2199 = vsel %vm2191, %v2160, 0
        %v2202 = vsel %vm2191, %v2161, 0
        %2204 = vmatprep.subr.bf16.mxu0 %v2155
        %2205 = vmatpush1.bf16.msra.mxu0 %v2154
        %2206 = vmatprep.subr.bf16.mxu0 %v2196
        %2207 = vmatpush1.bf16.msra.mxu0 %v2193
        %2208 = vmatprep.subr.bf16.mxu0 0
        %2209 = vmatpush1.bf16.msra.mxu0 0
        %2210 = vmatprep.subr.bf16.mxu0 0
        %2211 = vmatpush1.bf16.msra.mxu0 0
        %2212 = vmatprep.subr.bf16.mxu0 0
        %2213 = vmatpush1.bf16.msra.mxu0 0
        %2214 = vmatprep.subr.bf16.mxu0 0
        %2215 = vmatpush1.bf16.msra.mxu0 0
        %2216 = vmatprep.subr.bf16.mxu0 0
        %2217 = vmatpush1.bf16.msra.mxu0 0
        %2218 = vmatprep.subr.bf16.mxu0 0
        %2219 = vmatpush1.bf16.msra.mxu0 0
        %2220 = vmatprep.subr.bf16.mxu0 0
        %2221 = vmatpush1.bf16.msra.mxu0 0
        %2222 = vmatprep.subr.bf16.mxu0 0
        %2223 = vmatpush1.bf16.msra.mxu0 0
        %2224 = vmatprep.subr.bf16.mxu0 0
        %2225 = vmatpush1.bf16.msra.mxu0 0
        %2226 = vmatprep.subr.bf16.mxu0 0
        %2227 = vmatpush1.bf16.msra.mxu0 0
        %2228 = vmatprep.subr.bf16.mxu0 0
        %2229 = vmatpush1.bf16.msra.mxu0 0
        %2230 = vmatprep.subr.bf16.mxu0 0
        %2231 = vmatpush1.bf16.msra.mxu0 0
        %2232 = vmatprep.subr.bf16.mxu0 0
        %2233 = vmatpush1.bf16.msra.mxu0 0
        %2234 = vmatprep.subr.bf16.mxu0 0
        %2235 = vmatpush1.bf16.msra.mxu0 0
        %2236 = vmatprep.mubr.bf16.mxu0 0
        %2237 = vmatmul.mubr.bf16.gmra.mrb[0].mxu0 %v2168
        %v2238 = vpop.f32.mrb[0].mxu0
        %v2239 = vadd.f32 %v2119, %v2238
        %v2240 = vpop.f32.mrb[0].mxu0
        %v2241 = vadd.f32 %v2123, %v2240
        %v2242 = vpop.f32.mrb[0].mxu0
        %v2243 = vadd.f32 %v2119, %v2242
        %v2244 = vpop.f32.mrb[0].mxu0
        %v2245 = vadd.f32 %v2123, %v2244
        %2246 = vmatprep.mubr.bf16.mxu0 0
        %2247 = vmatmul.mubr.bf16.gmra.mrb[0].mxu0 %v2171
        %v2248 = vpop.f32.mrb[0].mxu0
        %v2249 = vadd.f32 %v2119, %v2248
        %v2250 = vpop.f32.mrb[0].mxu0
        %v2251 = vadd.f32 %v2123, %v2250
        %v2252 = vpop.f32.mrb[0].mxu0
        %v2253 = vadd.f32 %v2119, %v2252
        %v2254 = vpop.f32.mrb[0].mxu0
        %v2255 = vadd.f32 %v2123, %v2254
        %2256 = vmatprep.mubr.bf16.mxu0 0
        %2257 = vmatmul.mubr.bf16.gmra.mrb[0].mxu0 %v2174
        %v2258 = vpop.f32.mrb[0].mxu0
        %v2259 = vadd.f32 %v2119, %v2258
        %v2260 = vpop.f32.mrb[0].mxu0
        %v2261 = vadd.f32 %v2123, %v2260
        %v2262 = vpop.f32.mrb[0].mxu0
        %v2263 = vadd.f32 %v2119, %v2262
        %v2264 = vpop.f32.mrb[0].mxu0
        %v2265 = vadd.f32 %v2123, %v2264
        %2266 = vmatprep.mubr.bf16.mxu0 0
        %2267 = vmatmul.mubr.bf16.gmra.mrb[0].mxu0 %v2177
        %v2268 = vpop.f32.mrb[0].mxu0
        %v2269 = vadd.f32 %v2119, %v2268
        %v2270 = vpop.f32.mrb[0].mxu0
        %v2271 = vadd.f32 %v2123, %v2270
        %v2272 = vpop.f32.mrb[0].mxu0
        %v2273 = vadd.f32 %v2119, %v2272
        %v2274 = vpop.f32.mrb[0].mxu0
        %v2275 = vadd.f32 %v2123, %v2274
        %2276 = vmatprep.mubr.bf16.mxu0 0
        %2277 = vmatmul.mubr.bf16.gmra.mrb[0].mxu0 %v2180
        %v2278 = vpop.f32.mrb[0].mxu0
        %v2279 = vadd.f32 %v2119, %v2278
        %v2280 = vpop.f32.mrb[0].mxu0
        %v2281 = vadd.f32 %v2123, %v2280
        %v2282 = vpop.f32.mrb[0].mxu0
        %v2283 = vadd.f32 %v2119, %v2282
        %v2284 = vpop.f32.mrb[0].mxu0
        %v2285 = vadd.f32 %v2123, %v2284
        %2286 = vmatprep.mubr.bf16.mxu0 0
        %2287 = vmatmul.mubr.bf16.gmra.mrb[0].mxu0 %v2183
        %v2288 = vpop.f32.mrb[0].mxu0
        %v2289 = vadd.f32 %v2119, %v2288
        %v2290 = vpop.f32.mrb[0].mxu0
        %v2291 = vadd.f32 %v2123, %v2290
        %v2292 = vpop.f32.mrb[0].mxu0
        %v2293 = vadd.f32 %v2119, %v2292
        %v2294 = vpop.f32.mrb[0].mxu0
        %v2295 = vadd.f32 %v2123, %v2294
        %2296 = vmatprep.mubr.bf16.mxu0 0
        %2297 = vmatmul.mubr.bf16.gmra.mrb[0].mxu0 %v2186
        %v2298 = vpop.f32.mrb[0].mxu0
        %v2299 = vadd.f32 %v2119, %v2298
        %v2300 = vpop.f32.mrb[0].mxu0
        %v2301 = vadd.f32 %v2123, %v2300
        %v2302 = vpop.f32.mrb[0].mxu0
        %v2303 = vadd.f32 %v2119, %v2302
        %v2304 = vpop.f32.mrb[0].mxu0
        %v2305 = vadd.f32 %v2123, %v2304
        %2306 = vmatprep.mubr.bf16.mxu0 0
        %2307 = vmatmul.mubr.bf16.gmra.mrb[0].mxu0 %v2189
        %v2308 = vpop.f32.mrb[0].mxu0
        %v2309 = vadd.f32 %v2119, %v2308
        %v2310 = vpop.f32.mrb[0].mxu0
        %v2311 = vadd.f32 %v2123, %v2310
        %v2312 = vpop.f32.mrb[0].mxu0
        %v2313 = vadd.f32 %v2119, %v2312
        %v2314 = vpop.f32.mrb[0].mxu0
        %v2315 = vadd.f32 %v2123, %v2314
        %2316 = vdwg.mxu0
        %2317 = vmatprep.subr.bf16.mxu0 %v2157
        %2318 = vmatpush1.bf16.msra.mxu0 %v2156
        %2319 = vmatprep.subr.bf16.mxu0 %v2202
        %2320 = vmatpush1.bf16.msra.mxu0 %v2199
        %2321 = vmatprep.subr.bf16.mxu0 0
        %2322 = vmatpush1.bf16.msra.mxu0 0
        %2323 = vmatprep.subr.bf16.mxu0 0
        %2324 = vmatpush1.bf16.msra.mxu0 0
        %2325 = vmatprep.subr.bf16.mxu0 0
        %2326 = vmatpush1.bf16.msra.mxu0 0
        %2327 = vmatprep.subr.bf16.mxu0 0
        %2328 = vmatpush1.bf16.msra.mxu0 0
        %2329 = vmatprep.subr.bf16.mxu0 0
        %2330 = vmatpush1.bf16.msra.mxu0 0
        %2331 = vmatprep.subr.bf16.mxu0 0
        %2332 = vmatpush1.bf16.msra.mxu0 0
        %2333 = vmatprep.subr.bf16.mxu0 0
        %2334 = vmatpush1.bf16.msra.mxu0 0
        %2335 = vmatprep.subr.bf16.mxu0 0
        %2336 = vmatpush1.bf16.msra.mxu0 0
        %2337 = vmatprep.subr.bf16.mxu0 0
        %2338 = vmatpush1.bf16.msra.mxu0 0
        %2339 = vmatprep.subr.bf16.mxu0 0
        %2340 = vmatpush1.bf16.msra.mxu0 0
        %2341 = vmatprep.subr.bf16.mxu0 0
        %2342 = vmatpush1.bf16.msra.mxu0 0
        %2343 = vmatprep.subr.bf16.mxu0 0
        %2344 = vmatpush1.bf16.msra.mxu0 0
        %2345 = vmatprep.subr.bf16.mxu0 0
        %2346 = vmatpush1.bf16.msra.mxu0 0
        %2347 = vmatprep.subr.bf16.mxu0 0
        %2348 = vmatpush1.bf16.msra.mxu0 0
        %2349 = vmatprep.mubr.bf16.mxu0 0
        %2350 = vmatmul.mubr.bf16.gmra.mrb[0].mxu0 %v2168
        %v2351 = vpop.f32.mrb[0].mxu0
        %v2352 = vadd.f32 %v2127, %v2351
        %v2353 = vpop.f32.mrb[0].mxu0
        %v2354 = vadd.f32 %v2131, %v2353
        %v2355 = vpop.f32.mrb[0].mxu0
        %v2356 = vadd.f32 %v2127, %v2355
        %v2357 = vpop.f32.mrb[0].mxu0
        %v2358 = vadd.f32 %v2131, %v2357
        %2359 = vmatprep.mubr.bf16.mxu0 0
        %2360 = vmatmul.mubr.bf16.gmra.mrb[0].mxu0 %v2171
        %v2361 = vpop.f32.mrb[0].mxu0
        %v2362 = vadd.f32 %v2127, %v2361
        %v2363 = vpop.f32.mrb[0].mxu0
        %v2364 = vadd.f32 %v2131, %v2363
        %v2365 = vpop.f32.mrb[0].mxu0
        %v2366 = vadd.f32 %v2127, %v2365
        %v2367 = vpop.f32.mrb[0].mxu0
        %v2368 = vadd.f32 %v2131, %v2367
        %2369 = vmatprep.mubr.bf16.mxu0 0
        %2370 = vmatmul.mubr.bf16.gmra.mrb[0].mxu0 %v2174
        %v2371 = vpop.f32.mrb[0].mxu0
        %v2372 = vadd.f32 %v2127, %v2371
        %v2373 = vpop.f32.mrb[0].mxu0
        %v2374 = vadd.f32 %v2131, %v2373
        %v2375 = vpop.f32.mrb[0].mxu0
        %v2376 = vadd.f32 %v2127, %v2375
        %v2377 = vpop.f32.mrb[0].mxu0
        %v2378 = vadd.f32 %v2131, %v2377
        %2379 = vmatprep.mubr.bf16.mxu0 0
        %2380 = vmatmul.mubr.bf16.gmra.mrb[0].mxu0 %v2177
        %v2381 = vpop.f32.mrb[0].mxu0
        %v2382 = vadd.f32 %v2127, %v2381
        %v2383 = vpop.f32.mrb[0].mxu0
        %v2384 = vadd.f32 %v2131, %v2383
        %v2385 = vpop.f32.mrb[0].mxu0
        %v2386 = vadd.f32 %v2127, %v2385
        %v2387 = vpop.f32.mrb[0].mxu0
        %v2388 = vadd.f32 %v2131, %v2387
        %2389 = vmatprep.mubr.bf16.mxu0 0
        %2390 = vmatmul.mubr.bf16.gmra.mrb[0].mxu0 %v2180
        %v2391 = vpop.f32.mrb[0].mxu0
        %v2392 = vadd.f32 %v2127, %v2391
        %v2393 = vpop.f32.mrb[0].mxu0
        %v2394 = vadd.f32 %v2131, %v2393
        %v2395 = vpop.f32.mrb[0].mxu0
        %v2396 = vadd.f32 %v2127, %v2395
        %v2397 = vpop.f32.mrb[0].mxu0
        %v2398 = vadd.f32 %v2131, %v2397
        %2399 = vmatprep.mubr.bf16.mxu0 0
        %2400 = vmatmul.mubr.bf16.gmra.mrb[0].mxu0 %v2183
        %v2401 = vpop.f32.mrb[0].mxu0
        %v2402 = vadd.f32 %v2127, %v2401
        %v2403 = vpop.f32.mrb[0].mxu0
        %v2404 = vadd.f32 %v2131, %v2403
        %v2405 = vpop.f32.mrb[0].mxu0
        %v2406 = vadd.f32 %v2127, %v2405
        %v2407 = vpop.f32.mrb[0].mxu0
        %v2408 = vadd.f32 %v2131, %v2407
        %2409 = vmatprep.mubr.bf16.mxu0 0
        %2410 = vmatmul.mubr.bf16.gmra.mrb[0].mxu0 %v2186
        %v2411 = vpop.f32.mrb[0].mxu0
        %v2412 = vadd.f32 %v2127, %v2411
        %v2413 = vpop.f32.mrb[0].mxu0
        %v2414 = vadd.f32 %v2131, %v2413
        %v2415 = vpop.f32.mrb[0].mxu0
        %v2416 = vadd.f32 %v2127, %v2415
        %v2417 = vpop.f32.mrb[0].mxu0
        %v2418 = vadd.f32 %v2131, %v2417
        %2419 = vmatprep.mubr.bf16.mxu0 0
        %2420 = vmatmul.mubr.bf16.gmra.mrb[0].mxu0 %v2189
        %v2421 = vpop.f32.mrb[0].mxu0
        %v2422 = vadd.f32 %v2127, %v2421
        %v2423 = vpop.f32.mrb[0].mxu0
        %v2424 = vadd.f32 %v2131, %v2423
        %v2425 = vpop.f32.mrb[0].mxu0
        %v2426 = vadd.f32 %v2127, %v2425
        %v2427 = vpop.f32.mrb[0].mxu0
        %v2428 = vadd.f32 %v2131, %v2427
        %2429 = vdwg.mxu0
        %2430 = vst [vmem:[%s402] sm:$0xff] %v2239
        %2431 = vst [vmem:[%s402 + $0x8] sm:$0xff] %v2241
        %2432 = vst [vmem:[%s402 + $0x10] sm:$0xff] %v2352
        %2433 = vst [vmem:[%s402 + $0x18] sm:$0xff] %v2354
        %2434 = vst [vmem:[%s402 + $0x20] sm:$0xff] %v2243
        %2435 = vst [vmem:[%s402 + $0x28] sm:$0xff] %v2245
        %2436 = vst [vmem:[%s402 + $0x30] sm:$0xff] %v2356
        %2437 = vst [vmem:[%s402 + $0x38] sm:$0xff] %v2358
        %2438 = vst [vmem:[%s402 + $0x40] sm:$0xff] %v2249
        %2439 = vst [vmem:[%s402 + $0x48] sm:$0xff] %v2251
        %2440 = vst [vmem:[%s402 + $0x50] sm:$0xff] %v2362
        %2441 = vst [vmem:[%s402 + $0x58] sm:$0xff] %v2364
        %2442 = vst [vmem:[%s402 + $0x60] sm:$0xff] %v2253
        %2443 = vst [vmem:[%s402 + $0x68] sm:$0xff] %v2255
        %2444 = vst [vmem:[%s402 + $0x70] sm:$0xff] %v2366
        %2445 = vst [vmem:[%s402 + $0x78] sm:$0xff] %v2368
        %2446 = vst [vmem:[%s402 + $0x80] sm:$0xff] %v2259
        %2447 = vst [vmem:[%s402 + $0x88] sm:$0xff] %v2261
        %2448 = vst [vmem:[%s402 + $0x90] sm:$0xff] %v2372
        %2449 = vst [vmem:[%s402 + $0x98] sm:$0xff] %v2374
        %2450 = vst [vmem:[%s402 + $0xa0] sm:$0xff] %v2263
        %2451 = vst [vmem:[%s402 + $0xa8] sm:$0xff] %v2265
        %2452 = vst [vmem:[%s402 + $0xb0] sm:$0xff] %v2376
        %2453 = vst [vmem:[%s402 + $0xb8] sm:$0xff] %v2378
        %2454 = vst [vmem:[%s402 + $0xc0] sm:$0xff] %v2269
        %2455 = vst [vmem:[%s402 + $0xc8] sm:$0xff] %v2271
        %2456 = vst [vmem:[%s402 + $0xd0] sm:$0xff] %v2382
        %2457 = vst [vmem:[%s402 + $0xd8] sm:$0xff] %v2384
        %2458 = vst [vmem:[%s402 + $0xe0] sm:$0xff] %v2273
        %2459 = vst [vmem:[%s402 + $0xe8] sm:$0xff] %v2275
        %2460 = vst [vmem:[%s402 + $0xf0] sm:$0xff] %v2386
        %2461 = vst [vmem:[%s402 + $0xf8] sm:$0xff] %v2388
        %2462 = vst [vmem:[%s402 + $0x100] sm:$0xff] %v2279
        %2463 = vst [vmem:[%s402 + $0x108] sm:$0xff] %v2281
        %2464 = vst [vmem:[%s402 + $0x110] sm:$0xff] %v2392
        %2465 = vst [vmem:[%s402 + $0x118] sm:$0xff] %v2394
        %2466 = vst [vmem:[%s402 + $0x120] sm:$0xff] %v2283
        %2467 = vst [vmem:[%s402 + $0x128] sm:$0xff] %v2285
        %2468 = vst [vmem:[%s402 + $0x130] sm:$0xff] %v2396
        %2469 = vst [vmem:[%s402 + $0x138] sm:$0xff] %v2398
        %2470 = vst [vmem:[%s402 + $0x140] sm:$0xff] %v2289
        %2471 = vst [vmem:[%s402 + $0x148] sm:$0xff] %v2291
        %2472 = vst [vmem:[%s402 + $0x150] sm:$0xff] %v2402
        %2473 = vst [vmem:[%s402 + $0x158] sm:$0xff] %v2404
        %2474 = vst [vmem:[%s402 + $0x160] sm:$0xff] %v2293
        %2475 = vst [vmem:[%s402 + $0x168] sm:$0xff] %v2295
        %2476 = vst [vmem:[%s402 + $0x170] sm:$0xff] %v2406
        %2477 = vst [vmem:[%s402 + $0x178] sm:$0xff] %v2408
        %2478 = vst [vmem:[%s402 + $0x180] sm:$0xff] %v2299
        %2479 = vst [vmem:[%s402 + $0x188] sm:$0xff] %v2301
        %2480 = vst [vmem:[%s402 + $0x190] sm:$0xff] %v2412
        %2481 = vst [vmem:[%s402 + $0x198] sm:$0xff] %v2414
        %2482 = vst [vmem:[%s402 + $0x1a0] sm:$0xff] %v2303
        %2483 = vst [vmem:[%s402 + $0x1a8] sm:$0xff] %v2305
        %2484 = vst [vmem:[%s402 + $0x1b0] sm:$0xff] %v2416
        %2485 = vst [vmem:[%s402 + $0x1b8] sm:$0xff] %v2418
        %2486 = vst [vmem:[%s402 + $0x1c0] sm:$0xff] %v2309
        %2487 = vst [vmem:[%s402 + $0x1c8] sm:$0xff] %v2311
        %2488 = vst [vmem:[%s402 + $0x1d0] sm:$0xff] %v2422
        %2489 = vst [vmem:[%s402 + $0x1d8] sm:$0xff] %v2424
        %2490 = vst [vmem:[%s402 + $0x1e0] sm:$0xff] %v2313
        %2491 = vst [vmem:[%s402 + $0x1e8] sm:$0xff] %v2315
        %2492 = vst [vmem:[%s402 + $0x1f0] sm:$0xff] %v2426
        %2493 = vst [vmem:[%s402 + $0x1f8] sm:$0xff] %v2428
        %s2494 = sand.u32 %s246, 1
        %s2495 = sand.u32 %s246, 1
        %s2496 = smul.addr %s2495, 512
        %s2497 = scalar_lea.vmem [#allocation4], %s2496
        // Predicated region
        $region84: #{sae_forward.1} parent=74 // pred_check
          %p2498 = pneg %p256
        $region85: #{sae_forward.1} parent=74 // pred_check_branch
          %2500 = sbr.rel (%p2498) target = $region87
        $region86: #{sae_forward.1} parent=74 // pred_region
          %s2501 = smul.u32 16, %s24
          %s2502 = smul.u32 4, %s25
          %s2503 = smul.addr %s2501, 12
          %s2504 = sadd.s32 %s2502, %s2503
          %s2505 = smul.addr %s2504, 8
          %s2506 = scalar_lea.vmem %s9, %s2505
          // Predicated region
          $region88: #{sae_forward.1} parent=86 // pred_check
            _
          $region89: #{sae_forward.1} parent=86 // pred_check_branch
            %2508 = sbr.rel (0) target = $region91
          $region90: #{sae_forward.1} parent=86 // pred_region
            // Predicated region
            $region92: #{sae_forward.1} parent=90 // pred_check
              _
            $region93: #{sae_forward.1} parent=90 // pred_check_branch
              %2510 = sbr.rel (0) target = $region95
            $region94: #{sae_forward.1} parent=90 // pred_region
              loop: start=0, step=1, limit=1
              $region96: #{sae_forward.1} parent=94 // loop_pre_header
                _
              $region97: #{sae_forward.1} parent=94 // loop_header
                %s2512 = sphi 0, %s2516
                %p2513 = scmp.ge.s32.totalorder %s2512, 1
                %s2517 = sphi %s2497, %s2497
                %s2518 = sphi %s2506, %s2506
              $region98: #{sae_forward.1} parent=94 // loop_header_branch
                %2515 = sbr.rel (%p2513) target = $region102
              $region99: #{sae_forward.1} parent=94 // loop_body
                %v2519 = vld [vmem:[%s2517] sm:$0xff]
                %2520 = vst [vmem:[%s2518] sm:$0xff] %v2519
                %v2521 = vld [vmem:[%s2517 + $0x8] sm:$0xff]
                %2522 = vst [vmem:[%s2518 + $0x8] sm:$0xff] %v2521
                %v2523 = vld [vmem:[%s2517 + $0x10] sm:$0xff]
                %2524 = vst [vmem:[%s2518 + $0x10] sm:$0xff] %v2523
                %v2525 = vld [vmem:[%s2517 + $0x18] sm:$0xff]
                %2526 = vst [vmem:[%s2518 + $0x18] sm:$0xff] %v2525
                %v2527 = vld [vmem:[%s2517 + $0x20] sm:$0xff]
                %2528 = vst [vmem:[%s2518 + $0x60] sm:$0xff] %v2527
                %v2529 = vld [vmem:[%s2517 + $0x28] sm:$0xff]
                %2530 = vst [vmem:[%s2518 + $0x68] sm:$0xff] %v2529
                %v2531 = vld [vmem:[%s2517 + $0x30] sm:$0xff]
                %2532 = vst [vmem:[%s2518 + $0x70] sm:$0xff] %v2531
                %v2533 = vld [vmem:[%s2517 + $0x38] sm:$0xff]
                %2534 = vst [vmem:[%s2518 + $0x78] sm:$0xff] %v2533
                %v2535 = vld [vmem:[%s2517 + $0x40] sm:$0xff]
                %2536 = vst [vmem:[%s2518 + $0xc0] sm:$0xff] %v2535
                %v2537 = vld [vmem:[%s2517 + $0x48] sm:$0xff]
                %2538 = vst [vmem:[%s2518 + $0xc8] sm:$0xff] %v2537
                %v2539 = vld [vmem:[%s2517 + $0x50] sm:$0xff]
                %2540 = vst [vmem:[%s2518 + $0xd0] sm:$0xff] %v2539
                %v2541 = vld [vmem:[%s2517 + $0x58] sm:$0xff]
                %2542 = vst [vmem:[%s2518 + $0xd8] sm:$0xff] %v2541
                %v2543 = vld [vmem:[%s2517 + $0x60] sm:$0xff]
                %2544 = vst [vmem:[%s2518 + $0x120] sm:$0xff] %v2543
                %v2545 = vld [vmem:[%s2517 + $0x68] sm:$0xff]
                %2546 = vst [vmem:[%s2518 + $0x128] sm:$0xff] %v2545
                %v2547 = vld [vmem:[%s2517 + $0x70] sm:$0xff]
                %2548 = vst [vmem:[%s2518 + $0x130] sm:$0xff] %v2547
                %v2549 = vld [vmem:[%s2517 + $0x78] sm:$0xff]
                %2550 = vst [vmem:[%s2518 + $0x138] sm:$0xff] %v2549
                %v2551 = vld [vmem:[%s2517 + $0x80] sm:$0xff]
                %2552 = vst [vmem:[%s2518 + $0x180] sm:$0xff] %v2551
                %v2553 = vld [vmem:[%s2517 + $0x88] sm:$0xff]
                %2554 = vst [vmem:[%s2518 + $0x188] sm:$0xff] %v2553
                %v2555 = vld [vmem:[%s2517 + $0x90] sm:$0xff]
                %2556 = vst [vmem:[%s2518 + $0x190] sm:$0xff] %v2555
                %v2557 = vld [vmem:[%s2517 + $0x98] sm:$0xff]
                %2558 = vst [vmem:[%s2518 + $0x198] sm:$0xff] %v2557
                %v2559 = vld [vmem:[%s2517 + $0xa0] sm:$0xff]
                %2560 = vst [vmem:[%s2518 + $0x1e0] sm:$0xff] %v2559
                %v2561 = vld [vmem:[%s2517 + $0xa8] sm:$0xff]
                %2562 = vst [vmem:[%s2518 + $0x1e8] sm:$0xff] %v2561
                %v2563 = vld [vmem:[%s2517 + $0xb0] sm:$0xff]
                %2564 = vst [vmem:[%s2518 + $0x1f0] sm:$0xff] %v2563
                %v2565 = vld [vmem:[%s2517 + $0xb8] sm:$0xff]
                %2566 = vst [vmem:[%s2518 + $0x1f8] sm:$0xff] %v2565
                %v2567 = vld [vmem:[%s2517 + $0xc0] sm:$0xff]
                %2568 = vst [vmem:[%s2518 + $0x240] sm:$0xff] %v2567
                %v2569 = vld [vmem:[%s2517 + $0xc8] sm:$0xff]
                %2570 = vst [vmem:[%s2518 + $0x248] sm:$0xff] %v2569
                %v2571 = vld [vmem:[%s2517 + $0xd0] sm:$0xff]
                %2572 = vst [vmem:[%s2518 + $0x250] sm:$0xff] %v2571
                %v2573 = vld [vmem:[%s2517 + $0xd8] sm:$0xff]
                %2574 = vst [vmem:[%s2518 + $0x258] sm:$0xff] %v2573
                %v2575 = vld [vmem:[%s2517 + $0xe0] sm:$0xff]
                %2576 = vst [vmem:[%s2518 + $0x2a0] sm:$0xff] %v2575
                %v2577 = vld [vmem:[%s2517 + $0xe8] sm:$0xff]
                %2578 = vst [vmem:[%s2518 + $0x2a8] sm:$0xff] %v2577
                %v2579 = vld [vmem:[%s2517 + $0xf0] sm:$0xff]
                %2580 = vst [vmem:[%s2518 + $0x2b0] sm:$0xff] %v2579
                %v2581 = vld [vmem:[%s2517 + $0xf8] sm:$0xff]
                %2582 = vst [vmem:[%s2518 + $0x2b8] sm:$0xff] %v2581
                %v2583 = vld [vmem:[%s2517 + $0x100] sm:$0xff]
                %2584 = vst [vmem:[%s2518 + $0x300] sm:$0xff] %v2583
                %v2585 = vld [vmem:[%s2517 + $0x108] sm:$0xff]
                %2586 = vst [vmem:[%s2518 + $0x308] sm:$0xff] %v2585
                %v2587 = vld [vmem:[%s2517 + $0x110] sm:$0xff]
                %2588 = vst [vmem:[%s2518 + $0x310] sm:$0xff] %v2587
                %v2589 = vld [vmem:[%s2517 + $0x118] sm:$0xff]
                %2590 = vst [vmem:[%s2518 + $0x318] sm:$0xff] %v2589
                %v2591 = vld [vmem:[%s2517 + $0x120] sm:$0xff]
                %2592 = vst [vmem:[%s2518 + $0x360] sm:$0xff] %v2591
                %v2593 = vld [vmem:[%s2517 + $0x128] sm:$0xff]
                %2594 = vst [vmem:[%s2518 + $0x368] sm:$0xff] %v2593
                %v2595 = vld [vmem:[%s2517 + $0x130] sm:$0xff]
                %2596 = vst [vmem:[%s2518 + $0x370] sm:$0xff] %v2595
                %v2597 = vld [vmem:[%s2517 + $0x138] sm:$0xff]
                %2598 = vst [vmem:[%s2518 + $0x378] sm:$0xff] %v2597
                %v2599 = vld [vmem:[%s2517 + $0x140] sm:$0xff]
                %2600 = vst [vmem:[%s2518 + $0x3c0] sm:$0xff] %v2599
                %v2601 = vld [vmem:[%s2517 + $0x148] sm:$0xff]
                %2602 = vst [vmem:[%s2518 + $0x3c8] sm:$0xff] %v2601
                %v2603 = vld [vmem:[%s2517 + $0x150] sm:$0xff]
                %2604 = vst [vmem:[%s2518 + $0x3d0] sm:$0xff] %v2603
                %v2605 = vld [vmem:[%s2517 + $0x158] sm:$0xff]
                %2606 = vst [vmem:[%s2518 + $0x3d8] sm:$0xff] %v2605
                %v2607 = vld [vmem:[%s2517 + $0x160] sm:$0xff]
                %2608 = vst [vmem:[%s2518 + $0x420] sm:$0xff] %v2607
                %v2609 = vld [vmem:[%s2517 + $0x168] sm:$0xff]
                %2610 = vst [vmem:[%s2518 + $0x428] sm:$0xff] %v2609
                %v2611 = vld [vmem:[%s2517 + $0x170] sm:$0xff]
                %2612 = vst [vmem:[%s2518 + $0x430] sm:$0xff] %v2611
                %v2613 = vld [vmem:[%s2517 + $0x178] sm:$0xff]
                %2614 = vst [vmem:[%s2518 + $0x438] sm:$0xff] %v2613
                %v2615 = vld [vmem:[%s2517 + $0x180] sm:$0xff]
                %2616 = vst [vmem:[%s2518 + $0x480] sm:$0xff] %v2615
                %v2617 = vld [vmem:[%s2517 + $0x188] sm:$0xff]
                %2618 = vst [vmem:[%s2518 + $0x488] sm:$0xff] %v2617
                %v2619 = vld [vmem:[%s2517 + $0x190] sm:$0xff]
                %2620 = vst [vmem:[%s2518 + $0x490] sm:$0xff] %v2619
                %v2621 = vld [vmem:[%s2517 + $0x198] sm:$0xff]
                %2622 = vst [vmem:[%s2518 + $0x498] sm:$0xff] %v2621
                %v2623 = vld [vmem:[%s2517 + $0x1a0] sm:$0xff]
                %2624 = vst [vmem:[%s2518 + $0x4e0] sm:$0xff] %v2623
                %v2625 = vld [vmem:[%s2517 + $0x1a8] sm:$0xff]
                %2626 = vst [vmem:[%s2518 + $0x4e8] sm:$0xff] %v2625
                %v2627 = vld [vmem:[%s2517 + $0x1b0] sm:$0xff]
                %2628 = vst [vmem:[%s2518 + $0x4f0] sm:$0xff] %v2627
                %v2629 = vld [vmem:[%s2517 + $0x1b8] sm:$0xff]
                %2630 = vst [vmem:[%s2518 + $0x4f8] sm:$0xff] %v2629
                %v2631 = vld [vmem:[%s2517 + $0x1c0] sm:$0xff]
                %2632 = vst [vmem:[%s2518 + $0x540] sm:$0xff] %v2631
                %v2633 = vld [vmem:[%s2517 + $0x1c8] sm:$0xff]
                %2634 = vst [vmem:[%s2518 + $0x548] sm:$0xff] %v2633
                %v2635 = vld [vmem:[%s2517 + $0x1d0] sm:$0xff]
                %2636 = vst [vmem:[%s2518 + $0x550] sm:$0xff] %v2635
                %v2637 = vld [vmem:[%s2517 + $0x1d8] sm:$0xff]
                %2638 = vst [vmem:[%s2518 + $0x558] sm:$0xff] %v2637
                %v2639 = vld [vmem:[%s2517 + $0x1e0] sm:$0xff]
                %2640 = vst [vmem:[%s2518 + $0x5a0] sm:$0xff] %v2639
                %v2641 = vld [vmem:[%s2517 + $0x1e8] sm:$0xff]
                %2642 = vst [vmem:[%s2518 + $0x5a8] sm:$0xff] %v2641
                %v2643 = vld [vmem:[%s2517 + $0x1f0] sm:$0xff]
                %2644 = vst [vmem:[%s2518 + $0x5b0] sm:$0xff] %v2643
                %v2645 = vld [vmem:[%s2517 + $0x1f8] sm:$0xff]
                %2646 = vst [vmem:[%s2518 + $0x5b8] sm:$0xff] %v2645
              $region100: #{sae_forward.1} parent=94 // loop_footer
                %s2516 = sadd.s32 1, %s2512
              $region101: #{sae_forward.1} parent=94 // loop_footer_branch
                %2511 = sbr.rel target = $region97
              $region102: #{sae_forward.1} parent=94 // loop_exit
                _
            $region95: #{sae_forward.1} parent=90 // pred_fallthru
              _
            // Predicated region
            $region103: #{sae_forward.1} parent=90 // pred_check
              _
            $region104: #{sae_forward.1} parent=90 // pred_check_branch
              %2648 = sbr.rel target = $region106
            $region105: #{sae_forward.1} parent=90 // pred_region
              _
            $region106: #{sae_forward.1} parent=90 // pred_fallthru
              _
          $region91: #{sae_forward.1} parent=86 // pred_fallthru
            _
          %2649 = vnop
        $region87: #{sae_forward.1} parent=74 // pred_fallthru
          _
      $region75: #{sae_forward.1} parent=5 // pred_fallthru
        _
      %p2650 = scmp.le.s32.totalorder 2, %s15
      // Predicated region
      $region107: #{sae_forward.1} parent=5 // pred_check
        %p2651 = pneg %p2650
      $region108: #{sae_forward.1} parent=5 // pred_check_branch
        %2653 = sbr.rel (%p2651) target = $region110
      $region109: #{sae_forward.1} parent=5 // pred_region
        %s2654 = ssub.s32 %s15, 2
        // Predicated region
        $region111: #{sae_forward.1} parent=109 // pred_check
          %p2655 = pneg %p262
        $region112: #{sae_forward.1} parent=109 // pred_check_branch
          %2657 = sbr.rel (%p2655) target = $region114
        $region113: #{sae_forward.1} parent=109 // pred_region
          %s2658 = sand.u32 %s247, 1
          %s2659 = sand.u32 %s247, 1
          %s2660 = smul.addr %s2659, 512
          %s2661 = scalar_lea.vmem [#allocation4], %s2660
        $region114: #{sae_forward.1} parent=109 // pred_fallthru
          _
      $region110: #{sae_forward.1} parent=5 // pred_fallthru
        _
    $region6: #{sae_forward.1} parent=1 // loop_footer
      %s19 = sadd.s32 1, %s15
    $region7: #{sae_forward.1} parent=1 // loop_footer_branch
      %14 = sbr.rel target = $region3
    $region8: #{sae_forward.1} parent=1 // loop_exit
      _

</llo_original>
